<compile_context>
chip_gen: v5e
topology: v5e:2x2
jax: 0.10.0
libtpu: 0.0.40
codegen_flags: <defaults>
</compile_context>

<pallas_src>
import math

import jax
import jax.numpy as jnp
from jax.experimental import pallas as pl
from jax.experimental.pallas import tpu as pltpu


_VMEM_LIMIT = 32 * 1024 * 1024
# Halve the HBM-bound prev_Z stream of the score pass. Top-k ordering becomes
# slightly more rounding-sensitive; set to False if exact f32 score parity is
# required (scores in this module feed tanh(), which saturates for selected
# nodes, so the end-to-end result is insensitive).
_SCORE_MATMUL_BF16 = True


# ---------------------------------------------------------------------------
# Pallas kernels
# ---------------------------------------------------------------------------

def _score_kernel(scorer_ref, z_ref, mask_ref, out_ref):
    """out = scorer_n . rows(z_tile) + mask  -> lane-dense (1, TILE_N)."""
    # (1, R) x (TILE_N, R), contracting R of both operands -> (1, TILE_N).
    # Inputs may be bf16; accumulation / mask add stay f32.
    s = jax.lax.dot_general(
        scorer_ref[...], z_ref[...],
        dimension_numbers=(((1,), (1,)), ((), ())),
        preferred_element_type=jnp.float32)
    out_ref[...] = s + mask_ref[...]


def _gru_kernel(idx_ref,                        # (k,) int32, SMEM (scalar prefetch)
                scr_ref, qT_ref,                # (k,1) scores, (k,R) prev_Q^T
                wcat_ref, ucat_ref, uhT_ref,    # (R,3R), (R,2R), (R,R)
                bcat_ref,                       # (k,3R)
                z_hbm_ref,                      # (N,R) prev_Z left in HBM
                out_ref,                        # (k,R) = new_Q^T
                z_buf, dma_sem):                # scratch: VMEM (k,R), DMA sem (1,)
    k, r = z_buf.shape
    sem = dma_sem.at[0]

    # Kick off the k row-gather DMAs (scattered rows -> one small DMA each,
    # all signalling the same semaphore).
    copies = []
    for i in range(k):
        cp = pltpu.make_async_copy(z_hbm_ref.at[pl.ds(idx_ref[i], 1)],
                                   z_buf.at[pl.ds(i, 1)],
                                   sem)
        cp.start()
        copies.append(cp)

    # Overlap the q-only work (matmul + bias load + tanh) with the gathers.
    q = qT_ref[...]                                                  # (k, R)
    gq = jnp.dot(q, ucat_ref[...], preferred_element_type=jnp.float32)  # (k, 2R)
    b = bcat_ref[...]                                                # (k, 3R)
    tanh_s = jnp.tanh(scr_ref[...])                                  # (k, 1)

    # All copies are the same size and share one semaphore; the k-th wait can
    # only return once every gather has completed.
    for cp in copies:
        cp.wait()

    z = z_buf[...] * tanh_s                                          # z_topk^T

    # Fused gate matmuls (transposed formulation, no in-kernel transpose).
    gz = jnp.dot(z, wcat_ref[...], preferred_element_type=jnp.float32)   # (k, 3R)

    update = jax.nn.sigmoid(gz[:, :r] + gq[:, :r] + b[:, :r])
    reset = jax.nn.sigmoid(gz[:, r:2 * r] + gq[:, r:2 * r] + b[:, r:2 * r])
    h_in = reset * q
    h_cap = jnp.maximum(
        gz[:, 2 * r:]
        + jnp.dot(h_in, uhT_ref[...], preferred_element_type=jnp.float32)
        + b[:, 2 * r:],
        0.0)
    out_ref[...] = (1.0 - update) * q + update * h_cap


# ---------------------------------------------------------------------------
# pallas_call wrappers
# ---------------------------------------------------------------------------

def _choose_tile_n(n, r):
    """Node-tile for the score pass.

    VMEM estimate accounts for lane padding (a (tile, r) block occupies
    tile * round_up(r, 128) * 4 bytes per buffer, plus double-buffered
    mask/output rows), prefers a tile that divides N (no ragged tail), and
    keeps the grid length >= 2 so the "parallel" axis can shard across both
    TensorCores on v7x.
    """
    lanes = ((r + 127) // 128) * 128
    budget = 12 << 20                      # headroom inside 32 MiB scoped VMEM
    tile = 2048
    # double-buffered prev_Z block + double-buffered (8-sublane) mask/out rows
    while tile > 256 and (2 * tile * lanes * 4 + 4 * 8 * tile * 4) > budget:
        tile //= 2

    if n <= tile:
        # Whole array fits one block: split in two (when cleanly possible) so
        # the grid has >= 2 parallel steps for megacore sharding.
        half = n // 2
        if n >= 512 and n % 2 == 0 and half % 16 == 0:
            return half
        return n

    # Prefer a tile that divides n to avoid a ragged tail block entirely.
    t = tile
    while t > 256 and n % t != 0:
        t //= 2
    if n % t == 0:
        return t
    # No clean power-of-two divisor: keep the big tile; Pallas masks the
    # ragged tail block (no jnp.pad / extra HBM copy of prev_Z).
    return tile


def _scores(scorer_row, prev_z, mask):
    n, r = prev_z.shape
    if _SCORE_MATMUL_BF16:
        # In a full model this convert fuses with the producer of prev_Z; the
        # matmul itself accumulates in f32 (preferred_element_type).
        prev_z = prev_z.astype(jnp.bfloat16)
        scorer_row = scorer_row.astype(jnp.bfloat16)

    tile = _choose_tile_n(n, r)
    mask_row = mask.reshape(1, n)

    scores_row = pl.pallas_call(
        _score_kernel,
        out_shape=jax.ShapeDtypeStruct((1, n), jnp.float32),
        grid=(pl.cdiv(n, tile),),
        in_specs=[
            pl.BlockSpec((1, r), lambda i: (0, 0)),        # normalized scorer
            pl.BlockSpec((tile, r), lambda i: (i, 0)),     # prev_Z tile
            pl.BlockSpec((1, tile), lambda i: (0, i)),     # mask tile
        ],
        out_specs=pl.BlockSpec((1, tile), lambda i: (0, i)),
        compiler_params=pltpu.CompilerParams(
            dimension_semantics=("parallel",),
            vmem_limit_bytes=_VMEM_LIMIT),
    )(scorer_row, prev_z, mask_row)
    return scores_row[0, :n]


def _gru(packed, idx, sel_scores, prev_q, prev_z):
    r, k = prev_q.shape
    q_t = prev_q.T  # tiny (rows, cols) transpose in the wrapper

    grid_spec = pltpu.PrefetchScalarGridSpec(
        num_scalar_prefetch=1,
        grid=(1,),
        in_specs=[
            pl.BlockSpec((k, 1), lambda i, idx_ref: (0, 0)),       # sel scores
            pl.BlockSpec((k, r), lambda i, idx_ref: (0, 0)),       # prev_Q^T
            pl.BlockSpec((r, 3 * r), lambda i, idx_ref: (0, 0)),   # [Wu;Wr;Wh]^T
            pl.BlockSpec((r, 2 * r), lambda i, idx_ref: (0, 0)),   # [Uu;Ur]^T
            pl.BlockSpec((r, r), lambda i, idx_ref: (0, 0)),       # Uh^T
            pl.BlockSpec((k, 3 * r), lambda i, idx_ref: (0, 0)),   # [bu;br;bh]^T
            pl.BlockSpec(memory_space=pl.ANY),                     # prev_Z (HBM)
        ],
        out_specs=pl.BlockSpec((k, r), lambda i, idx_ref: (0, 0)),
        scratch_shapes=[
            pltpu.VMEM((k, r), jnp.float32),
            pltpu.SemaphoreType.DMA((1,)),      # one shared gather semaphore
        ],
    )
    new_q_t = pl.pallas_call(
        _gru_kernel,
        out_shape=jax.ShapeDtypeStruct((k, r), jnp.float32),
        grid_spec=grid_spec,
        compiler_params=pltpu.CompilerParams(
            dimension_semantics=("arbitrary",),
            vmem_limit_bytes=_VMEM_LIMIT),
    )(idx, sel_scores, q_t, packed["Wcat"], packed["Ucat"], packed["UhT"],
      packed["bcat"], prev_z)
    return new_q_t.T


# ---------------------------------------------------------------------------
# TopK index selection (data-dependent -> plain JAX glue)
# ---------------------------------------------------------------------------

def _topk_indices(scores_flat, k):
    # Mirrors the torch `k <= num_nodes` branch: take top-k, drop -inf
    # entries, pad with the last valid index.
    vals, idx = jax.lax.top_k(scores_flat, k)
    valid = vals > -jnp.inf
    num_valid = jnp.sum(valid.astype(jnp.int32))
    last_valid = idx[jnp.maximum(num_valid - 1, 0)]
    return jnp.where(valid, idx, last_valid)
    # TODO(synk): the k > num_nodes re-sampling branch of TopK.forward is not
    # implemented; the demo uses k <= num_nodes.


# ---------------------------------------------------------------------------
# Forward pass
# ---------------------------------------------------------------------------

@jax.jit
def mat_gru_cell_forward(packed, prev_Q, prev_Z, mask):
    cols = prev_Q.shape[1]
    scores_flat = _scores(packed["scorer_row"], prev_Z, mask.astype(jnp.float32))
    idx = _topk_indices(scores_flat, cols)
    # Tiny (k,) score gather stays in XLA; the (k, rows) node gather happens
    # inside the GRU kernel via scalar-prefetched DMAs.
    sel_scores = scores_flat[idx].reshape(cols, 1)
    return _gru(packed, idx, sel_scores, prev_Q, prev_Z)


# ---------------------------------------------------------------------------
# Parameters (torch layout for the reference) + one-time kernel packing
# ---------------------------------------------------------------------------

def init_params(key, rows, cols):
    ks = jax.random.split(key, 7)
    stdv_w = 1.0 / math.sqrt(rows)   # mat_GRU_gate.reset_param: 1/sqrt(size(1))
    stdv_s = 1.0 / math.sqrt(rows)   # TopK.reset_param: 1/sqrt(feats)

    def unif(k, shape, stdv):
        return jax.random.uniform(k, shape, jnp.float32, -stdv, stdv)

    return dict(
        scorer=unif(ks[0], (rows, 1), stdv_s),
        Wu=unif(ks[1], (rows, rows), stdv_w),
        Uu=unif(ks[2], (rows, rows), stdv_w),
        bu=jnp.zeros((rows, cols), jnp.float32),
        Wr=unif(ks[3], (rows, rows), stdv_w),
        Ur=unif(ks[4], (rows, rows), stdv_w),
        br=jnp.zeros((rows, cols), jnp.float32),
        Wh=unif(ks[5], (rows, rows), stdv_w),
        Uh=unif(ks[6], (rows, rows), stdv_w),
        bh=jnp.zeros((rows, cols), jnp.float32),
    )


def pack_params(p):
    """One-time packing into the kernel layout (transposed + fused gates)."""
    scorer = p["scorer"]
    scorer_row = (scorer / jnp.linalg.norm(scorer)).reshape(1, -1)
    return dict(
        scorer_row=scorer_row,
        Wcat=jnp.concatenate([p["Wu"].T, p["Wr"].T, p["Wh"].T], axis=1),
        Ucat=jnp.concatenate([p["Uu"].T, p["Ur"].T], axis=1),
        UhT=p["Uh"].T,
        bcat=jnp.concatenate([p["bu"].T, p["br"].T, p["bh"].T], axis=1),
    )


# Pure-JAX reference (mirrors the torch module; HIGHEST precision matmuls so
# the comparison is against true f32 math).
def _reference_forward(params, prev_Q, prev_Z, mask):
    hp = jax.lax.Precision.HIGHEST
    dot = lambda a, b: jnp.dot(a, b, precision=hp)
    scorer = params["scorer"]
    scores = dot(prev_Z, scorer) / jnp.linalg.norm(scorer) + mask.reshape(-1, 1)
    k = prev_Q.shape[1]
    idx = _topk_indices(scores.reshape(-1), k)
    z = (prev_Z[idx] * jnp.tanh(scores.reshape(-1)[idx].reshape(-1, 1))).T
    sig = jax.nn.sigmoid
    upd = sig(dot(params["Wu"], z) + dot(params["Uu"], prev_Q) + params["bu"])
    rst = sig(dot(params["Wr"], z) + dot(params["Ur"], prev_Q) + params["br"])
    hc = jnp.maximum(dot(params["Wh"], z) + dot(params["Uh"], rst * prev_Q)
                     + params["bh"], 0.0)
    return (1.0 - upd) * prev_Q + upd * hc


if __name__ == "__main__":
    rows, cols, num_nodes = 32, 8, 1024      # rows = feats/hidden, cols = k

    key = jax.random.PRNGKey(0)
    kp, kq, kz, km = jax.random.split(key, 4)
    params = init_params(kp, rows, cols)
    packed = pack_params(params)

    prev_Q = jax.random.normal(kq, (rows, cols), jnp.float32)
    prev_Z = jax.random.normal(kz, (num_nodes, rows), jnp.float32)

    # Plant cols+2 well-separated high-score rows so the top-k selection is
    # numerically unambiguous (f32-vs-bf16/MXU rounding cannot flip the chosen
    # indices between kernel and reference); mask two of them with -inf to
    # exercise the masking path.
    boost_rows = jnp.arange(0, (cols + 2) * 7, 7)
    unit_scorer = (params["scorer"] / jnp.linalg.norm(params["scorer"])).reshape(-1)
    boosts = 10.0 + 5.0 * jnp.arange(cols + 2, dtype=jnp.float32)
    prev_Z = prev_Z.at[boost_rows].add(boosts[:, None] * unit_scorer[None, :])
    mask = jnp.zeros((num_nodes,), jnp.float32)
    mask = mask.at[boost_rows[:2]].set(-jnp.inf)

    new_Q = mat_gru_cell_forward(packed, prev_Q, prev_Z, mask)
    new_Q = jax.block_until_ready(new_Q)

    ref = _reference_forward(params, prev_Q, prev_Z, mask)
    assert new_Q.shape == (rows, cols)
    err = float(jnp.max(jnp.abs(new_Q - ref)))
    assert jnp.allclose(new_Q, ref, atol=1e-2, rtol=1e-2), f"max abs err {err}"

    print("KERNEL_OK")
</pallas_src>

<mosaic_0001>
module attributes {stable_mosaic.version = 11 : i64} {
  func.func @_score_kernel(%arg0: i32, %arg1: memref<1x32xbf16, #tpu.memory_space<vmem>>, %arg2: memref<512x32xbf16, #tpu.memory_space<vmem>>, %arg3: memref<1x512xf32, #tpu.memory_space<vmem>>, %arg4: memref<1x512xf32, #tpu.memory_space<vmem>>) attributes {dimension_semantics = [#tpu.dimension_semantics<parallel>], iteration_bounds = array<i64: 2>, scalar_prefetch = 0 : i64, scratch_operands = 0 : i64, tpu.core_type = #tpu.core_type<tc>, window_params = [{pipeline_mode = #tpu.pipeline_mode<synchronous>, transform_indices = @transform_0, window_bounds = array<i64: 1, 32>}, {transform_indices = @transform_1, window_bounds = array<i64: 512, 32>}, {transform_indices = @transform_2, window_bounds = array<i64: 1, 512>}, {transform_indices = @transform_3, window_bounds = array<i64: 1, 512>}]} {
    %c0 = arith.constant 0 : index
    %c0_0 = arith.constant 0 : index
    %0 = vector.load %arg1[%c0, %c0_0] : memref<1x32xbf16, #tpu.memory_space<vmem>>, vector<1x32xbf16>
    %c0_1 = arith.constant 0 : index
    %c0_2 = arith.constant 0 : index
    %1 = vector.load %arg2[%c0_1, %c0_2] : memref<512x32xbf16, #tpu.memory_space<vmem>>, vector<512x32xbf16>
    %cst = arith.constant dense<0.000000e+00> : vector<1x512xf32>
    %2 = tpu.matmul %0, %1, %cst {dimension_numbers = #tpu.dot_dimension_numbers<[1], [1], [0], [0], [0, 0, 1, 0], [], []>} : vector<1x32xbf16>, vector<512x32xbf16>, vector<1x512xf32> -> vector<1x512xf32>
    %c0_3 = arith.constant 0 : index
    %c0_4 = arith.constant 0 : index
    %3 = vector.load %arg3[%c0_3, %c0_4] : memref<1x512xf32, #tpu.memory_space<vmem>>, vector<1x512xf32>
    %4 = arith.addf %2, %3 : vector<1x512xf32>
    %c0_5 = arith.constant 0 : index
    %c0_6 = arith.constant 0 : index
    %5 = vector.load %arg4[%c0_5, %c0_6] : memref<1x512xf32, #tpu.memory_space<vmem>>, vector<1x512xf32>
    tpu.vector_store %arg4[%c0_5, %c0_6], %4 {strides = array<i32>} : memref<1x512xf32, #tpu.memory_space<vmem>>, vector<1x512xf32>,
    return
  }
  func.func @transform_0(%arg0: i32) -> (i32, i32) {
    %c0_i32 = arith.constant 0 : i32
    %c0_i32_0 = arith.constant 0 : i32
    %c0_i32_1 = arith.constant 0 : i32
    return %c0_i32, %c0_i32_0 : i32, i32
  }
  func.func @transform_1(%arg0: i32) -> (i32, i32) {
    %c0_i32 = arith.constant 0 : i32
    %c0_i32_0 = arith.constant 0 : i32
    return %arg0, %c0_i32 : i32, i32
  }
  func.func @transform_2(%arg0: i32) -> (i32, i32) {
    %c0_i32 = arith.constant 0 : i32
    %c0_i32_0 = arith.constant 0 : i32
    return %c0_i32, %arg0 : i32, i32
  }
  func.func @transform_3(%arg0: i32) -> (i32, i32) {
    %c0_i32 = arith.constant 0 : i32
    %c0_i32_0 = arith.constant 0 : i32
    return %c0_i32, %arg0 : i32, i32
  }
}

module attributes {stable_mosaic.version = 11 : i64} {
  func.func @_gru_kernel(%arg0: i32, %arg1: memref<8xi32, #tpu.memory_space<smem>>, %arg2: memref<8x1xf32, #tpu.memory_space<vmem>>, %arg3: memref<8x32xf32, #tpu.memory_space<vmem>>, %arg4: memref<32x96xf32, #tpu.memory_space<vmem>>, %arg5: memref<32x64xf32, #tpu.memory_space<vmem>>, %arg6: memref<32x32xf32, #tpu.memory_space<vmem>>, %arg7: memref<8x96xf32, #tpu.memory_space<vmem>>, %arg8: memref<1024x32xf32, #tpu.memory_space<any>>, %arg9: memref<8x32xf32, #tpu.memory_space<vmem>>, %arg10: memref<8x32xf32, #tpu.memory_space<vmem>>, %arg11: memref<1x!tpu.dma_semaphore, #tpu.memory_space<semaphore_mem>>) attributes {dimension_semantics = [#tpu.dimension_semantics<arbitrary>], iteration_bounds = array<i64: 1>, scalar_prefetch = 1 : i64, scratch_operands = 2 : i64, tpu.core_type = #tpu.core_type<tc>, window_params = [{pipeline_mode = #tpu.pipeline_mode<synchronous>, transform_indices = @transform_0, window_bounds = array<i64: 8, 1>}, {pipeline_mode = #tpu.pipeline_mode<synchronous>, transform_indices = @transform_1, window_bounds = array<i64: 8, 32>}, {pipeline_mode = #tpu.pipeline_mode<synchronous>, transform_indices = @transform_2, window_bounds = array<i64: 32, 96>}, {pipeline_mode = #tpu.pipeline_mode<synchronous>, transform_indices = @transform_3, window_bounds = array<i64: 32, 64>}, {pipeline_mode = #tpu.pipeline_mode<synchronous>, transform_indices = @transform_4, window_bounds = array<i64: 32, 32>}, {pipeline_mode = #tpu.pipeline_mode<synchronous>, transform_indices = @transform_5, window_bounds = array<i64: 8, 96>}, {}, {pipeline_mode = #tpu.pipeline_mode<synchronous>, transform_indices = @transform_7, window_bounds = array<i64: 8, 32>}]} {
    %c0 = arith.constant 0 : index
    %0 = memref.load %arg1[%c0] : memref<8xi32, #tpu.memory_space<smem>>
    %c0_i32 = arith.constant 0 : i32
    %c0_i32_0 = arith.constant 0 : i32
    %1 = tpu.memref_slice %arg8[%0, %c0_i32_0] : memref<1024x32xf32, #tpu.memory_space<any>> -> memref<1x32xf32, #tpu.memory_space<any>>
    %c0_i32_1 = arith.constant 0 : i32
    %c0_i32_2 = arith.constant 0 : i32
    %2 = tpu.memref_slice %arg10[%c0_i32_1, %c0_i32_2] : memref<8x32xf32, #tpu.memory_space<vmem>> -> memref<1x32xf32, #tpu.memory_space<vmem>>
    %3 = tpu.memref_slice %arg11[%c0_i32] : memref<1x!tpu.dma_semaphore, #tpu.memory_space<semaphore_mem>> -> memref<1x!tpu.dma_semaphore, #tpu.memory_space<semaphore_mem>>
    %4 = tpu.memref_squeeze %3 : memref<1x!tpu.dma_semaphore, #tpu.memory_space<semaphore_mem>> -> memref<!tpu.dma_semaphore, #tpu.memory_space<semaphore_mem>>
    tpu.enqueue_dma source(%1 : memref<1x32xf32, #tpu.memory_space<any>>) target(%2 : memref<1x32xf32, #tpu.memory_space<vmem>>) target_semaphore(%4 : memref<!tpu.dma_semaphore, #tpu.memory_space<semaphore_mem>>)
    %c1 = arith.constant 1 : index
    %5 = memref.load %arg1[%c1] : memref<8xi32, #tpu.memory_space<smem>>
    %c0_i32_3 = arith.constant 0 : i32
    %c0_i32_4 = arith.constant 0 : i32
    %6 = tpu.memref_slice %arg8[%5, %c0_i32_4] : memref<1024x32xf32, #tpu.memory_space<any>> -> memref<1x32xf32, #tpu.memory_space<any>>
    %c1_i32 = arith.constant 1 : i32
    %c0_i32_5 = arith.constant 0 : i32
    %7 = tpu.memref_slice %arg10[%c1_i32, %c0_i32_5] : memref<8x32xf32, #tpu.memory_space<vmem>> -> memref<1x32xf32, #tpu.memory_space<vmem>>
    %8 = tpu.memref_slice %arg11[%c0_i32_3] : memref<1x!tpu.dma_semaphore, #tpu.memory_space<semaphore_mem>> -> memref<1x!tpu.dma_semaphore, #tpu.memory_space<semaphore_mem>>
    %9 = tpu.memref_squeeze %8 : memref<1x!tpu.dma_semaphore, #tpu.memory_space<semaphore_mem>> -> memref<!tpu.dma_semaphore, #tpu.memory_space<semaphore_mem>>
    tpu.enqueue_dma source(%6 : memref<1x32xf32, #tpu.memory_space<any>>) target(%7 : memref<1x32xf32, #tpu.memory_space<vmem>>) target_semaphore(%9 : memref<!tpu.dma_semaphore, #tpu.memory_space<semaphore_mem>>)
    %c2 = arith.constant 2 : index
    %10 = memref.load %arg1[%c2] : memref<8xi32, #tpu.memory_space<smem>>
    %c0_i32_6 = arith.constant 0 : i32
    %c0_i32_7 = arith.constant 0 : i32
    %11 = tpu.memref_slice %arg8[%10, %c0_i32_7] : memref<1024x32xf32, #tpu.memory_space<any>> -> memref<1x32xf32, #tpu.memory_space<any>>
    %c2_i32 = arith.constant 2 : i32
    %c0_i32_8 = arith.constant 0 : i32
    %12 = tpu.memref_slice %arg10[%c2_i32, %c0_i32_8] : memref<8x32xf32, #tpu.memory_space<vmem>> -> memref<1x32xf32, #tpu.memory_space<vmem>>
    %13 = tpu.memref_slice %arg11[%c0_i32_6] : memref<1x!tpu.dma_semaphore, #tpu.memory_space<semaphore_mem>> -> memref<1x!tpu.dma_semaphore, #tpu.memory_space<semaphore_mem>>
    %14 = tpu.memref_squeeze %13 : memref<1x!tpu.dma_semaphore, #tpu.memory_space<semaphore_mem>> -> memref<!tpu.dma_semaphore, #tpu.memory_space<semaphore_mem>>
    tpu.enqueue_dma source(%11 : memref<1x32xf32, #tpu.memory_space<any>>) target(%12 : memref<1x32xf32, #tpu.memory_space<vmem>>) target_semaphore(%14 : memref<!tpu.dma_semaphore, #tpu.memory_space<semaphore_mem>>)
    %c3 = arith.constant 3 : index
    %15 = memref.load %arg1[%c3] : memref<8xi32, #tpu.memory_space<smem>>
    %c0_i32_9 = arith.constant 0 : i32
    %c0_i32_10 = arith.constant 0 : i32
    %16 = tpu.memref_slice %arg8[%15, %c0_i32_10] : memref<1024x32xf32, #tpu.memory_space<any>> -> memref<1x32xf32, #tpu.memory_space<any>>
    %c3_i32 = arith.constant 3 : i32
    %c0_i32_11 = arith.constant 0 : i32
    %17 = tpu.memref_slice %arg10[%c3_i32, %c0_i32_11] : memref<8x32xf32, #tpu.memory_space<vmem>> -> memref<1x32xf32, #tpu.memory_space<vmem>>
    %18 = tpu.memref_slice %arg11[%c0_i32_9] : memref<1x!tpu.dma_semaphore, #tpu.memory_space<semaphore_mem>> -> memref<1x!tpu.dma_semaphore, #tpu.memory_space<semaphore_mem>>
    %19 = tpu.memref_squeeze %18 : memref<1x!tpu.dma_semaphore, #tpu.memory_space<semaphore_mem>> -> memref<!tpu.dma_semaphore, #tpu.memory_space<semaphore_mem>>
    tpu.enqueue_dma source(%16 : memref<1x32xf32, #tpu.memory_space<any>>) target(%17 : memref<1x32xf32, #tpu.memory_space<vmem>>) target_semaphore(%19 : memref<!tpu.dma_semaphore, #tpu.memory_space<semaphore_mem>>)
    %c4 = arith.constant 4 : index
    %20 = memref.load %arg1[%c4] : memref<8xi32, #tpu.memory_space<smem>>
    %c0_i32_12 = arith.constant 0 : i32
    %c0_i32_13 = arith.constant 0 : i32
    %21 = tpu.memref_slice %arg8[%20, %c0_i32_13] : memref<1024x32xf32, #tpu.memory_space<any>> -> memref<1x32xf32, #tpu.memory_space<any>>
    %c4_i32 = arith.constant 4 : i32
    %c0_i32_14 = arith.constant 0 : i32
    %22 = tpu.memref_slice %arg10[%c4_i32, %c0_i32_14] : memref<8x32xf32, #tpu.memory_space<vmem>> -> memref<1x32xf32, #tpu.memory_space<vmem>>
    %23 = tpu.memref_slice %arg11[%c0_i32_12] : memref<1x!tpu.dma_semaphore, #tpu.memory_space<semaphore_mem>> -> memref<1x!tpu.dma_semaphore, #tpu.memory_space<semaphore_mem>>
    %24 = tpu.memref_squeeze %23 : memref<1x!tpu.dma_semaphore, #tpu.memory_space<semaphore_mem>> -> memref<!tpu.dma_semaphore, #tpu.memory_space<semaphore_mem>>
    tpu.enqueue_dma source(%21 : memref<1x32xf32, #tpu.memory_space<any>>) target(%22 : memref<1x32xf32, #tpu.memory_space<vmem>>) target_semaphore(%24 : memref<!tpu.dma_semaphore, #tpu.memory_space<semaphore_mem>>)
    %c5 = arith.constant 5 : index
    %25 = memref.load %arg1[%c5] : memref<8xi32, #tpu.memory_space<smem>>
    %c0_i32_15 = arith.constant 0 : i32
    %c0_i32_16 = arith.constant 0 : i32
    %26 = tpu.memref_slice %arg8[%25, %c0_i32_16] : memref<1024x32xf32, #tpu.memory_space<any>> -> memref<1x32xf32, #tpu.memory_space<any>>
    %c5_i32 = arith.constant 5 : i32
    %c0_i32_17 = arith.constant 0 : i32
    %27 = tpu.memref_slice %arg10[%c5_i32, %c0_i32_17] : memref<8x32xf32, #tpu.memory_space<vmem>> -> memref<1x32xf32, #tpu.memory_space<vmem>>
    %28 = tpu.memref_slice %arg11[%c0_i32_15] : memref<1x!tpu.dma_semaphore, #tpu.memory_space<semaphore_mem>> -> memref<1x!tpu.dma_semaphore, #tpu.memory_space<semaphore_mem>>
    %29 = tpu.memref_squeeze %28 : memref<1x!tpu.dma_semaphore, #tpu.memory_space<semaphore_mem>> -> memref<!tpu.dma_semaphore, #tpu.memory_space<semaphore_mem>>
    tpu.enqueue_dma source(%26 : memref<1x32xf32, #tpu.memory_space<any>>) target(%27 : memref<1x32xf32, #tpu.memory_space<vmem>>) target_semaphore(%29 : memref<!tpu.dma_semaphore, #tpu.memory_space<semaphore_mem>>)
    %c6 = arith.constant 6 : index
    %30 = memref.load %arg1[%c6] : memref<8xi32, #tpu.memory_space<smem>>
    %c0_i32_18 = arith.constant 0 : i32
    %c0_i32_19 = arith.constant 0 : i32
    %31 = tpu.memref_slice %arg8[%30, %c0_i32_19] : memref<1024x32xf32, #tpu.memory_space<any>> -> memref<1x32xf32, #tpu.memory_space<any>>
    %c6_i32 = arith.constant 6 : i32
    %c0_i32_20 = arith.constant 0 : i32
    %32 = tpu.memref_slice %arg10[%c6_i32, %c0_i32_20] : memref<8x32xf32, #tpu.memory_space<vmem>> -> memref<1x32xf32, #tpu.memory_space<vmem>>
    %33 = tpu.memref_slice %arg11[%c0_i32_18] : memref<1x!tpu.dma_semaphore, #tpu.memory_space<semaphore_mem>> -> memref<1x!tpu.dma_semaphore, #tpu.memory_space<semaphore_mem>>
    %34 = tpu.memref_squeeze %33 : memref<1x!tpu.dma_semaphore, #tpu.memory_space<semaphore_mem>> -> memref<!tpu.dma_semaphore, #tpu.memory_space<semaphore_mem>>
    tpu.enqueue_dma source(%31 : memref<1x32xf32, #tpu.memory_space<any>>) target(%32 : memref<1x32xf32, #tpu.memory_space<vmem>>) target_semaphore(%34 : memref<!tpu.dma_semaphore, #tpu.memory_space<semaphore_mem>>)
    %c7 = arith.constant 7 : index
    %35 = memref.load %arg1[%c7] : memref<8xi32, #tpu.memory_space<smem>>
    %c0_i32_21 = arith.constant 0 : i32
    %c0_i32_22 = arith.constant 0 : i32
    %36 = tpu.memref_slice %arg8[%35, %c0_i32_22] : memref<1024x32xf32, #tpu.memory_space<any>> -> memref<1x32xf32, #tpu.memory_space<any>>
    %c7_i32 = arith.constant 7 : i32
    %c0_i32_23 = arith.constant 0 : i32
    %37 = tpu.memref_slice %arg10[%c7_i32, %c0_i32_23] : memref<8x32xf32, #tpu.memory_space<vmem>> -> memref<1x32xf32, #tpu.memory_space<vmem>>
    %38 = tpu.memref_slice %arg11[%c0_i32_21] : memref<1x!tpu.dma_semaphore, #tpu.memory_space<semaphore_mem>> -> memref<1x!tpu.dma_semaphore, #tpu.memory_space<semaphore_mem>>
    %39 = tpu.memref_squeeze %38 : memref<1x!tpu.dma_semaphore, #tpu.memory_space<semaphore_mem>> -> memref<!tpu.dma_semaphore, #tpu.memory_space<semaphore_mem>>
    tpu.enqueue_dma source(%36 : memref<1x32xf32, #tpu.memory_space<any>>) target(%37 : memref<1x32xf32, #tpu.memory_space<vmem>>) target_semaphore(%39 : memref<!tpu.dma_semaphore, #tpu.memory_space<semaphore_mem>>)
    %c0_24 = arith.constant 0 : index
    %c0_25 = arith.constant 0 : index
    %40 = vector.load %arg3[%c0_24, %c0_25] : memref<8x32xf32, #tpu.memory_space<vmem>>, vector<8x32xf32>
    %c0_26 = arith.constant 0 : index
    %c0_27 = arith.constant 0 : index
    %41 = vector.load %arg5[%c0_26, %c0_27] : memref<32x64xf32, #tpu.memory_space<vmem>>, vector<32x64xf32>
    %cst = arith.constant dense<0.000000e+00> : vector<8x64xf32>
    %42 = tpu.matmul %40, %41, %cst {dimension_numbers = #tpu.dot_dimension_numbers<[1], [0], [0], [1], [0, 0, 1, 1], [], []>} : vector<8x32xf32>, vector<32x64xf32>, vector<8x64xf32> -> vector<8x64xf32>
    %c0_28 = arith.constant 0 : index
    %c0_29 = arith.constant 0 : index
    %43 = vector.load %arg7[%c0_28, %c0_29] : memref<8x96xf32, #tpu.memory_space<vmem>>, vector<8x96xf32>
    %c0_30 = arith.constant 0 : index
    %c0_31 = arith.constant 0 : index
    %44 = vector.load %arg2[%c0_30, %c0_31] : memref<8x1xf32, #tpu.memory_space<vmem>>, vector<8x1xf32>
    %45 = math.tanh %44 : vector<8x1xf32>
    %c0_i32_32 = arith.constant 0 : i32
    %c0_i32_33 = arith.constant 0 : i32
    %46 = tpu.memref_slice %arg8[%0, %c0_i32_33] : memref<1024x32xf32, #tpu.memory_space<any>> -> memref<1x32xf32, #tpu.memory_space<any>>
    %c0_i32_34 = arith.constant 0 : i32
    %c0_i32_35 = arith.constant 0 : i32
    %47 = tpu.memref_slice %arg10[%c0_i32_34, %c0_i32_35] : memref<8x32xf32, #tpu.memory_space<vmem>> -> memref<1x32xf32, #tpu.memory_space<vmem>>
    %48 = tpu.memref_slice %arg11[%c0_i32_32] : memref<1x!tpu.dma_semaphore, #tpu.memory_space<semaphore_mem>> -> memref<1x!tpu.dma_semaphore, #tpu.memory_space<semaphore_mem>>
    %49 = tpu.memref_squeeze %48 : memref<1x!tpu.dma_semaphore, #tpu.memory_space<semaphore_mem>> -> memref<!tpu.dma_semaphore, #tpu.memory_space<semaphore_mem>>
    tpu.wait_dma2 semaphore(%49 : memref<!tpu.dma_semaphore, #tpu.memory_space<semaphore_mem>>) src(%46 : memref<1x32xf32, #tpu.memory_space<any>>) dst(%47 : memref<1x32xf32, #tpu.memory_space<vmem>>)
    %c0_i32_36 = arith.constant 0 : i32
    %c0_i32_37 = arith.constant 0 : i32
    %50 = tpu.memref_slice %arg8[%5, %c0_i32_37] : memref<1024x32xf32, #tpu.memory_space<any>> -> memref<1x32xf32, #tpu.memory_space<any>>
    %c1_i32_38 = arith.constant 1 : i32
    %c0_i32_39 = arith.constant 0 : i32
    %51 = tpu.memref_slice %arg10[%c1_i32_38, %c0_i32_39] : memref<8x32xf32, #tpu.memory_space<vmem>> -> memref<1x32xf32, #tpu.memory_space<vmem>>
    %52 = tpu.memref_slice %arg11[%c0_i32_36] : memref<1x!tpu.dma_semaphore, #tpu.memory_space<semaphore_mem>> -> memref<1x!tpu.dma_semaphore, #tpu.memory_space<semaphore_mem>>
    %53 = tpu.memref_squeeze %52 : memref<1x!tpu.dma_semaphore, #tpu.memory_space<semaphore_mem>> -> memref<!tpu.dma_semaphore, #tpu.memory_space<semaphore_mem>>
    tpu.wait_dma2 semaphore(%53 : memref<!tpu.dma_semaphore, #tpu.memory_space<semaphore_mem>>) src(%50 : memref<1x32xf32, #tpu.memory_space<any>>) dst(%51 : memref<1x32xf32, #tpu.memory_space<vmem>>)
    %c0_i32_40 = arith.constant 0 : i32
    %c0_i32_41 = arith.constant 0 : i32
    %54 = tpu.memref_slice %arg8[%10, %c0_i32_41] : memref<1024x32xf32, #tpu.memory_space<any>> -> memref<1x32xf32, #tpu.memory_space<any>>
    %c2_i32_42 = arith.constant 2 : i32
    %c0_i32_43 = arith.constant 0 : i32
    %55 = tpu.memref_slice %arg10[%c2_i32_42, %c0_i32_43] : memref<8x32xf32, #tpu.memory_space<vmem>> -> memref<1x32xf32, #tpu.memory_space<vmem>>
    %56 = tpu.memref_slice %arg11[%c0_i32_40] : memref<1x!tpu.dma_semaphore, #tpu.memory_space<semaphore_mem>> -> memref<1x!tpu.dma_semaphore, #tpu.memory_space<semaphore_mem>>
    %57 = tpu.memref_squeeze %56 : memref<1x!tpu.dma_semaphore, #tpu.memory_space<semaphore_mem>> -> memref<!tpu.dma_semaphore, #tpu.memory_space<semaphore_mem>>
    tpu.wait_dma2 semaphore(%57 : memref<!tpu.dma_semaphore, #tpu.memory_space<semaphore_mem>>) src(%54 : memref<1x32xf32, #tpu.memory_space<any>>) dst(%55 : memref<1x32xf32, #tpu.memory_space<vmem>>)
    %c0_i32_44 = arith.constant 0 : i32
    %c0_i32_45 = arith.constant 0 : i32
    %58 = tpu.memref_slice %arg8[%15, %c0_i32_45] : memref<1024x32xf32, #tpu.memory_space<any>> -> memref<1x32xf32, #tpu.memory_space<any>>
    %c3_i32_46 = arith.constant 3 : i32
    %c0_i32_47 = arith.constant 0 : i32
    %59 = tpu.memref_slice %arg10[%c3_i32_46, %c0_i32_47] : memref<8x32xf32, #tpu.memory_space<vmem>> -> memref<1x32xf32, #tpu.memory_space<vmem>>
    %60 = tpu.memref_slice %arg11[%c0_i32_44] : memref<1x!tpu.dma_semaphore, #tpu.memory_space<semaphore_mem>> -> memref<1x!tpu.dma_semaphore, #tpu.memory_space<semaphore_mem>>
    %61 = tpu.memref_squeeze %60 : memref<1x!tpu.dma_semaphore, #tpu.memory_space<semaphore_mem>> -> memref<!tpu.dma_semaphore, #tpu.memory_space<semaphore_mem>>
    tpu.wait_dma2 semaphore(%61 : memref<!tpu.dma_semaphore, #tpu.memory_space<semaphore_mem>>) src(%58 : memref<1x32xf32, #tpu.memory_space<any>>) dst(%59 : memref<1x32xf32, #tpu.memory_space<vmem>>)
    %c0_i32_48 = arith.constant 0 : i32
    %c0_i32_49 = arith.constant 0 : i32
    %62 = tpu.memref_slice %arg8[%20, %c0_i32_49] : memref<1024x32xf32, #tpu.memory_space<any>> -> memref<1x32xf32, #tpu.memory_space<any>>
    %c4_i32_50 = arith.constant 4 : i32
    %c0_i32_51 = arith.constant 0 : i32
    %63 = tpu.memref_slice %arg10[%c4_i32_50, %c0_i32_51] : memref<8x32xf32, #tpu.memory_space<vmem>> -> memref<1x32xf32, #tpu.memory_space<vmem>>
    %64 = tpu.memref_slice %arg11[%c0_i32_48] : memref<1x!tpu.dma_semaphore, #tpu.memory_space<semaphore_mem>> -> memref<1x!tpu.dma_semaphore, #tpu.memory_space<semaphore_mem>>
    %65 = tpu.memref_squeeze %64 : memref<1x!tpu.dma_semaphore, #tpu.memory_space<semaphore_mem>> -> memref<!tpu.dma_semaphore, #tpu.memory_space<semaphore_mem>>
    tpu.wait_dma2 semaphore(%65 : memref<!tpu.dma_semaphore, #tpu.memory_space<semaphore_mem>>) src(%62 : memref<1x32xf32, #tpu.memory_space<any>>) dst(%63 : memref<1x32xf32, #tpu.memory_space<vmem>>)
    %c0_i32_52 = arith.constant 0 : i32
    %c0_i32_53 = arith.constant 0 : i32
    %66 = tpu.memref_slice %arg8[%25, %c0_i32_53] : memref<1024x32xf32, #tpu.memory_space<any>> -> memref<1x32xf32, #tpu.memory_space<any>>
    %c5_i32_54 = arith.constant 5 : i32
    %c0_i32_55 = arith.constant 0 : i32
    %67 = tpu.memref_slice %arg10[%c5_i32_54, %c0_i32_55] : memref<8x32xf32, #tpu.memory_space<vmem>> -> memref<1x32xf32, #tpu.memory_space<vmem>>
    %68 = tpu.memref_slice %arg11[%c0_i32_52] : memref<1x!tpu.dma_semaphore, #tpu.memory_space<semaphore_mem>> -> memref<1x!tpu.dma_semaphore, #tpu.memory_space<semaphore_mem>>
    %69 = tpu.memref_squeeze %68 : memref<1x!tpu.dma_semaphore, #tpu.memory_space<semaphore_mem>> -> memref<!tpu.dma_semaphore, #tpu.memory_space<semaphore_mem>>
    tpu.wait_dma2 semaphore(%69 : memref<!tpu.dma_semaphore, #tpu.memory_space<semaphore_mem>>) src(%66 : memref<1x32xf32, #tpu.memory_space<any>>) dst(%67 : memref<1x32xf32, #tpu.memory_space<vmem>>)
    %c0_i32_56 = arith.constant 0 : i32
    %c0_i32_57 = arith.constant 0 : i32
    %70 = tpu.memref_slice %arg8[%30, %c0_i32_57] : memref<1024x32xf32, #tpu.memory_space<any>> -> memref<1x32xf32, #tpu.memory_space<any>>
    %c6_i32_58 = arith.constant 6 : i32
    %c0_i32_59 = arith.constant 0 : i32
    %71 = tpu.memref_slice %arg10[%c6_i32_58, %c0_i32_59] : memref<8x32xf32, #tpu.memory_space<vmem>> -> memref<1x32xf32, #tpu.memory_space<vmem>>
    %72 = tpu.memref_slice %arg11[%c0_i32_56] : memref<1x!tpu.dma_semaphore, #tpu.memory_space<semaphore_mem>> -> memref<1x!tpu.dma_semaphore, #tpu.memory_space<semaphore_mem>>
    %73 = tpu.memref_squeeze %72 : memref<1x!tpu.dma_semaphore, #tpu.memory_space<semaphore_mem>> -> memref<!tpu.dma_semaphore, #tpu.memory_space<semaphore_mem>>
    tpu.wait_dma2 semaphore(%73 : memref<!tpu.dma_semaphore, #tpu.memory_space<semaphore_mem>>) src(%70 : memref<1x32xf32, #tpu.memory_space<any>>) dst(%71 : memref<1x32xf32, #tpu.memory_space<vmem>>)
    %c0_i32_60 = arith.constant 0 : i32
    %c0_i32_61 = arith.constant 0 : i32
    %74 = tpu.memref_slice %arg8[%35, %c0_i32_61] : memref<1024x32xf32, #tpu.memory_space<any>> -> memref<1x32xf32, #tpu.memory_space<any>>
    %c7_i32_62 = arith.constant 7 : i32
    %c0_i32_63 = arith.constant 0 : i32
    %75 = tpu.memref_slice %arg10[%c7_i32_62, %c0_i32_63] : memref<8x32xf32, #tpu.memory_space<vmem>> -> memref<1x32xf32, #tpu.memory_space<vmem>>
    %76 = tpu.memref_slice %arg11[%c0_i32_60] : memref<1x!tpu.dma_semaphore, #tpu.memory_space<semaphore_mem>> -> memref<1x!tpu.dma_semaphore, #tpu.memory_space<semaphore_mem>>
    %77 = tpu.memref_squeeze %76 : memref<1x!tpu.dma_semaphore, #tpu.memory_space<semaphore_mem>> -> memref<!tpu.dma_semaphore, #tpu.memory_space<semaphore_mem>>
    tpu.wait_dma2 semaphore(%77 : memref<!tpu.dma_semaphore, #tpu.memory_space<semaphore_mem>>) src(%74 : memref<1x32xf32, #tpu.memory_space<any>>) dst(%75 : memref<1x32xf32, #tpu.memory_space<vmem>>)
    %c0_64 = arith.constant 0 : index
    %c0_65 = arith.constant 0 : index
    %78 = vector.load %arg10[%c0_64, %c0_65] : memref<8x32xf32, #tpu.memory_space<vmem>>, vector<8x32xf32>
    %79 = vector.broadcast %45 : vector<8x1xf32> to vector<8x32xf32>
    %80 = arith.mulf %78, %79 : vector<8x32xf32>
    %c0_66 = arith.constant 0 : index
    %c0_67 = arith.constant 0 : index
    %81 = vector.load %arg4[%c0_66, %c0_67] : memref<32x96xf32, #tpu.memory_space<vmem>>, vector<32x96xf32>
    %cst_68 = arith.constant dense<0.000000e+00> : vector<8x96xf32>
    %82 = tpu.matmul %80, %81, %cst_68 {dimension_numbers = #tpu.dot_dimension_numbers<[1], [0], [0], [1], [0, 0, 1, 1], [], []>} : vector<8x32xf32>, vector<32x96xf32>, vector<8x96xf32> -> vector<8x96xf32>
    %83 = vector.extract_strided_slice %82 {offsets = [0, 0], sizes = [8, 32], strides = [1, 1]} : vector<8x96xf32> to vector<8x32xf32>
    %84 = vector.extract_strided_slice %42 {offsets = [0, 0], sizes = [8, 32], strides = [1, 1]} : vector<8x64xf32> to vector<8x32xf32>
    %85 = arith.addf %83, %84 : vector<8x32xf32>
    %86 = vector.extract_strided_slice %43 {offsets = [0, 0], sizes = [8, 32], strides = [1, 1]} : vector<8x96xf32> to vector<8x32xf32>
    %87 = arith.addf %85, %86 : vector<8x32xf32>
    %88 = arith.negf %87 : vector<8x32xf32>
    %89 = math.exp %88 : vector<8x32xf32>
    %cst_69 = arith.constant 1.000000e+00 : f32
    %90 = vector.broadcast %cst_69 : f32 to vector<8x32xf32>
    %91 = arith.addf %90, %89 : vector<8x32xf32>
    %92 = arith.divf %90, %91 : vector<8x32xf32>
    %93 = vector.extract_strided_slice %82 {offsets = [0, 32], sizes = [8, 32], strides = [1, 1]} : vector<8x96xf32> to vector<8x32xf32>
    %94 = vector.extract_strided_slice %42 {offsets = [0, 32], sizes = [8, 32], strides = [1, 1]} : vector<8x64xf32> to vector<8x32xf32>
    %95 = arith.addf %93, %94 : vector<8x32xf32>
    %96 = vector.extract_strided_slice %43 {offsets = [0, 32], sizes = [8, 32], strides = [1, 1]} : vector<8x96xf32> to vector<8x32xf32>
    %97 = arith.addf %95, %96 : vector<8x32xf32>
    %98 = arith.negf %97 : vector<8x32xf32>
    %99 = math.exp %98 : vector<8x32xf32>
    %cst_70 = arith.constant 1.000000e+00 : f32
    %100 = vector.broadcast %cst_70 : f32 to vector<8x32xf32>
    %101 = arith.addf %100, %99 : vector<8x32xf32>
    %102 = arith.divf %100, %101 : vector<8x32xf32>
    %103 = arith.mulf %102, %40 : vector<8x32xf32>
    %104 = vector.extract_strided_slice %82 {offsets = [0, 64], sizes = [8, 32], strides = [1, 1]} : vector<8x96xf32> to vector<8x32xf32>
    %c0_71 = arith.constant 0 : index
    %c0_72 = arith.constant 0 : index
    %105 = vector.load %arg6[%c0_71, %c0_72] : memref<32x32xf32, #tpu.memory_space<vmem>>, vector<32x32xf32>
    %cst_73 = arith.constant dense<0.000000e+00> : vector<8x32xf32>
    %106 = tpu.matmul %103, %105, %cst_73 {dimension_numbers = #tpu.dot_dimension_numbers<[1], [0], [0], [1], [0, 0, 1, 1], [], []>} : vector<8x32xf32>, vector<32x32xf32>, vector<8x32xf32> -> vector<8x32xf32>
    %107 = arith.addf %104, %106 : vector<8x32xf32>
    %108 = vector.extract_strided_slice %43 {offsets = [0, 64], sizes = [8, 32], strides = [1, 1]} : vector<8x96xf32> to vector<8x32xf32>
    %109 = arith.addf %107, %108 : vector<8x32xf32>
    %cst_74 = arith.constant 0.000000e+00 : f32
    %110 = vector.broadcast %cst_74 : f32 to vector<8x32xf32>
    %111 = arith.maximumf %109, %110 : vector<8x32xf32>
    %cst_75 = arith.constant 1.000000e+00 : f32
    %112 = vector.broadcast %cst_75 : f32 to vector<8x32xf32>
    %113 = arith.subf %112, %92 : vector<8x32xf32>
    %114 = arith.mulf %113, %40 : vector<8x32xf32>
    %115 = arith.mulf %92, %111 : vector<8x32xf32>
    %116 = arith.addf %114, %115 : vector<8x32xf32>
    %c0_76 = arith.constant 0 : index
    %c0_77 = arith.constant 0 : index
    %117 = vector.load %arg9[%c0_76, %c0_77] : memref<8x32xf32, #tpu.memory_space<vmem>>, vector<8x32xf32>
    tpu.vector_store %arg9[%c0_76, %c0_77], %116 {strides = array<i32>} : memref<8x32xf32, #tpu.memory_space<vmem>>, vector<8x32xf32>,
    return
  }
  func.func @transform_0(%arg0: i32, %arg1: memref<8xi32, #tpu.memory_space<smem>>) -> (i32, i32) {
    %c0_i32 = arith.constant 0 : i32
    %c0_i32_0 = arith.constant 0 : i32
    %c0_i32_1 = arith.constant 0 : i32
    return %c0_i32, %c0_i32_0 : i32, i32
  }
  func.func @transform_1(%arg0: i32, %arg1: memref<8xi32, #tpu.memory_space<smem>>) -> (i32, i32) {
    %c0_i32 = arith.constant 0 : i32
    %c0_i32_0 = arith.constant 0 : i32
    %c0_i32_1 = arith.constant 0 : i32
    return %c0_i32, %c0_i32_0 : i32, i32
  }
  func.func @transform_2(%arg0: i32, %arg1: memref<8xi32, #tpu.memory_space<smem>>) -> (i32, i32) {
    %c0_i32 = arith.constant 0 : i32
    %c0_i32_0 = arith.constant 0 : i32
    %c0_i32_1 = arith.constant 0 : i32
    return %c0_i32, %c0_i32_0 : i32, i32
  }
  func.func @transform_3(%arg0: i32, %arg1: memref<8xi32, #tpu.memory_space<smem>>) -> (i32, i32) {
    %c0_i32 = arith.constant 0 : i32
    %c0_i32_0 = arith.constant 0 : i32
    %c0_i32_1 = arith.constant 0 : i32
    return %c0_i32, %c0_i32_0 : i32, i32
  }
  func.func @transform_4(%arg0: i32, %arg1: memref<8xi32, #tpu.memory_space<smem>>) -> (i32, i32) {
    %c0_i32 = arith.constant 0 : i32
    %c0_i32_0 = arith.constant 0 : i32
    %c0_i32_1 = arith.constant 0 : i32
    return %c0_i32, %c0_i32_0 : i32, i32
  }
  func.func @transform_5(%arg0: i32, %arg1: memref<8xi32, #tpu.memory_space<smem>>) -> (i32, i32) {
    %c0_i32 = arith.constant 0 : i32
    %c0_i32_0 = arith.constant 0 : i32
    %c0_i32_1 = arith.constant 0 : i32
    return %c0_i32, %c0_i32_0 : i32, i32
  }
  func.func @transform_7(%arg0: i32, %arg1: memref<8xi32, #tpu.memory_space<smem>>) -> (i32, i32) {
    %c0_i32 = arith.constant 0 : i32
    %c0_i32_0 = arith.constant 0 : i32
    %c0_i32_1 = arith.constant 0 : i32
    return %c0_i32, %c0_i32_0 : i32, i32
  }
}

</mosaic_0001>

<llo_original>
// kernel: mat_gru_cell_forward.2
$region0: #{mat_gru_cell_forward.2}
  #allocation0 [shape = 'u32[]', space=smem, size = 0x4, offset = 0x4, fixed_abs, tag = 'smem constant byte address 0x4 - core index']
  #allocation1 [shape = 'u32[72,128]{1,0:T(1,128)}', space=vmem, size = 0x9000, scoped, tag = 'internal scratch']
  %s0 = inlined_call_operand.vmem [shape: bf16[1,32], index: 0, kind: input, shape index: {}]
  %s1 = inlined_call_operand.vmem [shape: bf16[1024,32], index: 1, kind: input, shape index: {}]
  %s2 = inlined_call_operand.vmem [shape: f32[1,1024], index: 2, kind: input, shape index: {}]
  %s3 = inlined_call_operand.vmem [shape: f32[1,1024], index: 3, kind: output, shape index: {}]
  %s4 = sld [smem:[#allocation0]]
  $region45: #{mat_gru_cell_forward.2} parent=0
    _
  %s6 = ssub.s32 1, %s4
  %s7 = scalar_select 0, %s6, %s4
  loop: start=0, step=1, limit=4
  $region2: #{mat_gru_cell_forward.2} parent=0 // loop_pre_header
    _
  $region3: #{mat_gru_cell_forward.2} parent=0 // loop_header
    %s9 = sphi 0, %s13
    %p10 = scmp.ge.s32.totalorder %s9, 4
    %s17 = sphi 0, %s17
    %s19 = sphi 0, %s17
    %s20 = sphi 0, %s19
    %s34 = sphi 0, %s20
    %s40 = sphi 0, %s42
    %s43 = sphi 0, %s40
    %s44 = sphi 0, %s43
    %s60 = sphi 0, %s44
    %s66 = sphi 0, %s68
    %s69 = sphi 0, %s66
    %s70 = sphi 0, %s69
    %s86 = sphi 0, %s70
    %s92 = sphi 0, %s94
    %s95 = sphi 0, %s92
    %s96 = sphi 0, %s95
    %s112 = sphi 0, %s96
  $region4: #{mat_gru_cell_forward.2} parent=0 // loop_header_branch
    %12 = sbr.rel (%p10) target = $region8
  $region5: #{mat_gru_cell_forward.2} parent=0 // loop_body
    %s14 = ssub.s32 %s9, 1
    %s15 = ssub.s32 %s9, 2
    %s16 = sadd.s32 %s9, 1
    %s18 = sadd.s32 %s17, 1
    %p21 = scmp.eq.s32.totalorder %s9, 1
    %p22 = scmp.ne.s32.totalorder %s17, %s19
    %p23 = scmp.eq.s32.totalorder %s9, 0
    %p24 = por %p22, %p23
    %p25 = scmp.ne.s32.totalorder %s17, %s19
    %p26 = scmp.eq.s32.totalorder %s14, 1
    %p27 = por %p25, %p26
    %p28 = scmp.ne.s32.totalorder %s19, %s20
    %p29 = scmp.eq.s32.totalorder %s14, 0
    %p30 = por %p28, %p29
    %p31 = scmp.ne.s32.totalorder %s19, %s20
    %p32 = scmp.eq.s32.totalorder %s15, 1
    %p33 = por %p31, %p32
    %p35 = scmp.ne.s32.totalorder %s20, %s34
    %p36 = scmp.eq.s32.totalorder %s15, 0
    %p37 = por %p35, %p36
    %s38 = ssub.s32 %s9, %s16
    %p39 = scmp.eq.s32.totalorder %s38, 0
    %s41 = sadd.s32 %s40, 1
    %s42 = scalar_select %p39, %s40, %s41
    %p45 = pneg %p39
    %p46 = scmp.eq.s32.totalorder %s9, 1
    %p47 = por %p45, %p46
    %p48 = scmp.ne.s32.totalorder %s40, %s43
    %p49 = scmp.eq.s32.totalorder %s9, 0
    %p50 = por %p48, %p49
    %p51 = scmp.ne.s32.totalorder %s40, %s43
    %p52 = scmp.eq.s32.totalorder %s14, 1
    %p53 = por %p51, %p52
    %p54 = scmp.ne.s32.totalorder %s43, %s44
    %p55 = scmp.eq.s32.totalorder %s14, 0
    %p56 = por %p54, %p55
    %p57 = scmp.ne.s32.totalorder %s43, %s44
    %p58 = scmp.eq.s32.totalorder %s15, 1
    %p59 = por %p57, %p58
    %p61 = scmp.ne.s32.totalorder %s44, %s60
    %p62 = scmp.eq.s32.totalorder %s15, 0
    %p63 = por %p61, %p62
    %s64 = ssub.s32 %s9, %s16
    %p65 = scmp.eq.s32.totalorder %s64, 0
    %s67 = sadd.s32 %s66, 1
    %s68 = scalar_select %p65, %s66, %s67
    %p71 = pneg %p65
    %p72 = scmp.eq.s32.totalorder %s9, 1
    %p73 = por %p71, %p72
    %p74 = scmp.ne.s32.totalorder %s66, %s69
    %p75 = scmp.eq.s32.totalorder %s9, 0
    %p76 = por %p74, %p75
    %p77 = scmp.ne.s32.totalorder %s66, %s69
    %p78 = scmp.eq.s32.totalorder %s14, 1
    %p79 = por %p77, %p78
    %p80 = scmp.ne.s32.totalorder %s69, %s70
    %p81 = scmp.eq.s32.totalorder %s14, 0
    %p82 = por %p80, %p81
    %p83 = scmp.ne.s32.totalorder %s69, %s70
    %p84 = scmp.eq.s32.totalorder %s15, 1
    %p85 = por %p83, %p84
    %p87 = scmp.ne.s32.totalorder %s70, %s86
    %p88 = scmp.eq.s32.totalorder %s15, 0
    %p89 = por %p87, %p88
    %s90 = ssub.s32 %s9, %s16
    %p91 = scmp.eq.s32.totalorder %s90, 0
    %s93 = sadd.s32 %s92, 1
    %s94 = scalar_select %p91, %s92, %s93
    %p97 = pneg %p91
    %p98 = scmp.eq.s32.totalorder %s9, 1
    %p99 = por %p97, %p98
    %p100 = scmp.ne.s32.totalorder %s92, %s95
    %p101 = scmp.eq.s32.totalorder %s9, 0
    %p102 = por %p100, %p101
    %p103 = scmp.ne.s32.totalorder %s92, %s95
    %p104 = scmp.eq.s32.totalorder %s14, 1
    %p105 = por %p103, %p104
    %p106 = scmp.ne.s32.totalorder %s95, %s96
    %p107 = scmp.eq.s32.totalorder %s14, 0
    %p108 = por %p106, %p107
    %p109 = scmp.ne.s32.totalorder %s95, %s96
    %p110 = scmp.eq.s32.totalorder %s15, 1
    %p111 = por %p109, %p110
    %p113 = scmp.ne.s32.totalorder %s96, %s112
    %p114 = scmp.eq.s32.totalorder %s15, 0
    %p115 = por %p113, %p114
    %p116 = scmp.le.s32.totalorder 1, %s9
    %p117 = scmp.lt.s32.totalorder %s9, 3
    %p118 = pnand %p116, %p117
    %p119 = pneg %p118
    // Predicated region
    $region9: #{mat_gru_cell_forward.2} parent=5 // pred_check
      _
    $region10: #{mat_gru_cell_forward.2} parent=5 // pred_check_branch
      %121 = sbr.rel (%p118) target = $region12
    $region11: #{mat_gru_cell_forward.2} parent=5 // pred_region
      %s122 = ssub.s32 %s9, 1
      // Predicated region
      $region13: #{mat_gru_cell_forward.2} parent=11 // pred_check
        %p123 = pneg %p30
      $region14: #{mat_gru_cell_forward.2} parent=11 // pred_check_branch
        %125 = sbr.rel (%p123) target = $region16
      $region15: #{mat_gru_cell_forward.2} parent=11 // pred_region
        _
      $region16: #{mat_gru_cell_forward.2} parent=11 // pred_fallthru
        _
    $region12: #{mat_gru_cell_forward.2} parent=5 // pred_fallthru
      _
    %p126 = scmp.lt.s32.totalorder %s9, 2
    // Predicated region
    $region17: #{mat_gru_cell_forward.2} parent=5 // pred_check
      %p127 = pneg %p126
    $region18: #{mat_gru_cell_forward.2} parent=5 // pred_check_branch
      %129 = sbr.rel (%p127) target = $region20
    $region19: #{mat_gru_cell_forward.2} parent=5 // pred_region
      // Predicated region
      $region21: #{mat_gru_cell_forward.2} parent=19 // pred_check
        %p130 = pneg %p50
      $region22: #{mat_gru_cell_forward.2} parent=19 // pred_check_branch
        %132 = sbr.rel (%p130) target = $region24
      $region23: #{mat_gru_cell_forward.2} parent=19 // pred_region
        %s133 = smul.u32 64, %s9
        %p134 = scmp.lt.s32.totalorder %s133, 127
        %s135 = scalar_select %p134, %s133, 127
        %s136 = smul.addr %s135, 4
        %s137 = scalar_lea.vmem %s1, %s136
        %s138 = smul.u32 64, %s9
      $region24: #{mat_gru_cell_forward.2} parent=19 // pred_fallthru
        _
      // Predicated region
      $region25: #{mat_gru_cell_forward.2} parent=19 // pred_check
        %p139 = pneg %p76
      $region26: #{mat_gru_cell_forward.2} parent=19 // pred_check_branch
        %141 = sbr.rel (%p139) target = $region28
      $region27: #{mat_gru_cell_forward.2} parent=19 // pred_region
        %s142 = smul.u32 4, %s9
        %p143 = scmp.lt.s32.totalorder %s142, 7
        %s144 = scalar_select %p143, %s142, 7
        %s145 = scalar_lea.vmem %s2, %s144
        %s146 = smul.u32 4, %s9
      $region28: #{mat_gru_cell_forward.2} parent=19 // pred_fallthru
        _
    $region20: #{mat_gru_cell_forward.2} parent=5 // pred_fallthru
      _
    %p147 = scmp.le.s32.totalorder 1, %s9
    %p148 = scmp.lt.s32.totalorder %s9, 3
    %p149 = pnand %p147, %p148
    %p150 = pneg %p149
    // Predicated region
    $region29: #{mat_gru_cell_forward.2} parent=5 // pred_check
      _
    $region30: #{mat_gru_cell_forward.2} parent=5 // pred_check_branch
      %152 = sbr.rel (%p149) target = $region32
    $region31: #{mat_gru_cell_forward.2} parent=5 // pred_region
      %s153 = ssub.s32 %s9, 1
      %p154 = pneg %p30
      %p155 = pneg %p27
      %s156 = smul.u32 64, %s14
      %p157 = scmp.lt.s32.totalorder %s156, 127
      %s158 = scalar_select %p157, %s156, 127
      %s159 = smul.addr %s158, 4
      %s160 = scalar_lea.vmem %s1, %s159
      %p161 = pneg %p56
      %p162 = pneg %p53
      %s163 = smul.u32 4, %s14
      %p164 = scmp.lt.s32.totalorder %s163, 7
      %s165 = scalar_select %p164, %s163, 7
      %s166 = scalar_lea.vmem %s2, %s165
      %p167 = pneg %p82
      %p168 = pneg %p79
      %p169 = pneg %p108
      %p170 = pneg %p105
      %s171 = smul.u32 4, %s14
      %p172 = scmp.lt.s32.totalorder %s171, 7
      %s173 = scalar_select %p172, %s171, 7
      %s174 = scalar_lea.vmem %s3, %s173
      %s175 = smul.u32 64, %s14
      %p176 = scmp.lt.s32.totalorder %s175, 127
      %s177 = scalar_select %p176, %s175, 127
      %s178 = smul.addr %s177, 4
      %s179 = scalar_lea.vmem %s1, %s178
      %s180 = smul.u32 64, %s14
      %s181 = smul.u32 4, %s14
      %p182 = scmp.lt.s32.totalorder %s181, 7
      %s183 = scalar_select %p182, %s181, 7
      %s184 = scalar_lea.vmem %s2, %s183
      %s185 = smul.u32 4, %s14
      %s186 = smul.u32 4, %s14
      %p187 = scmp.lt.s32.totalorder %s186, 7
      %s188 = scalar_select %p187, %s186, 7
      %s189 = scalar_lea.vmem %s3, %s188
      %s190 = smul.u32 4, %s14
      %v191 = vld [vmem:[%s0] sm:$0x1]
      %v192 = vld [vmem:[%s179] sm:$0xf]
      %v193 = vld [vmem:[%s179 + $0x4] sm:$0xf]
      %v194 = vld [vmem:[%s179 + $0x8] sm:$0xf]
      %v195 = vld [vmem:[%s179 + $0xc] sm:$0xf]
      %v196 = vld [vmem:[%s179 + $0x10] sm:$0xf]
      %v197 = vld [vmem:[%s179 + $0x14] sm:$0xf]
      %v198 = vld [vmem:[%s179 + $0x18] sm:$0xf]
      %v199 = vld [vmem:[%s179 + $0x1c] sm:$0xf]
      %v200 = vld [vmem:[%s179 + $0x20] sm:$0xf]
      %v201 = vld [vmem:[%s179 + $0x24] sm:$0xf]
      %v202 = vld [vmem:[%s179 + $0x28] sm:$0xf]
      %v203 = vld [vmem:[%s179 + $0x2c] sm:$0xf]
      %v204 = vld [vmem:[%s179 + $0x30] sm:$0xf]
      %v205 = vld [vmem:[%s179 + $0x34] sm:$0xf]
      %v206 = vld [vmem:[%s179 + $0x38] sm:$0xf]
      %v207 = vld [vmem:[%s179 + $0x3c] sm:$0xf]
      %v208 = vld [vmem:[%s179 + $0x40] sm:$0xf]
      %v209 = vld [vmem:[%s179 + $0x44] sm:$0xf]
      %v210 = vld [vmem:[%s179 + $0x48] sm:$0xf]
      %v211 = vld [vmem:[%s179 + $0x4c] sm:$0xf]
      %v212 = vld [vmem:[%s179 + $0x50] sm:$0xf]
      %v213 = vld [vmem:[%s179 + $0x54] sm:$0xf]
      %v214 = vld [vmem:[%s179 + $0x58] sm:$0xf]
      %v215 = vld [vmem:[%s179 + $0x5c] sm:$0xf]
      %v216 = vld [vmem:[%s179 + $0x60] sm:$0xf]
      %v217 = vld [vmem:[%s179 + $0x64] sm:$0xf]
      %v218 = vld [vmem:[%s179 + $0x68] sm:$0xf]
      %v219 = vld [vmem:[%s179 + $0x6c] sm:$0xf]
      %v220 = vld [vmem:[%s179 + $0x70] sm:$0xf]
      %v221 = vld [vmem:[%s179 + $0x74] sm:$0xf]
      %v222 = vld [vmem:[%s179 + $0x78] sm:$0xf]
      %v223 = vld [vmem:[%s179 + $0x7c] sm:$0xf]
      %v224 = vld [vmem:[%s179 + $0x80] sm:$0xf]
      %v225 = vld [vmem:[%s179 + $0x84] sm:$0xf]
      %v226 = vld [vmem:[%s179 + $0x88] sm:$0xf]
      %v227 = vld [vmem:[%s179 + $0x8c] sm:$0xf]
      %v228 = vld [vmem:[%s179 + $0x90] sm:$0xf]
      %v229 = vld [vmem:[%s179 + $0x94] sm:$0xf]
      %v230 = vld [vmem:[%s179 + $0x98] sm:$0xf]
      %v231 = vld [vmem:[%s179 + $0x9c] sm:$0xf]
      %v232 = vld [vmem:[%s179 + $0xa0] sm:$0xf]
      %v233 = vld [vmem:[%s179 + $0xa4] sm:$0xf]
      %v234 = vld [vmem:[%s179 + $0xa8] sm:$0xf]
      %v235 = vld [vmem:[%s179 + $0xac] sm:$0xf]
      %v236 = vld [vmem:[%s179 + $0xb0] sm:$0xf]
      %v237 = vld [vmem:[%s179 + $0xb4] sm:$0xf]
      %v238 = vld [vmem:[%s179 + $0xb8] sm:$0xf]
      %v239 = vld [vmem:[%s179 + $0xbc] sm:$0xf]
      %v240 = vld [vmem:[%s179 + $0xc0] sm:$0xf]
      %v241 = vld [vmem:[%s179 + $0xc4] sm:$0xf]
      %v242 = vld [vmem:[%s179 + $0xc8] sm:$0xf]
      %v243 = vld [vmem:[%s179 + $0xcc] sm:$0xf]
      %v244 = vld [vmem:[%s179 + $0xd0] sm:$0xf]
      %v245 = vld [vmem:[%s179 + $0xd4] sm:$0xf]
      %v246 = vld [vmem:[%s179 + $0xd8] sm:$0xf]
      %v247 = vld [vmem:[%s179 + $0xdc] sm:$0xf]
      %v248 = vld [vmem:[%s179 + $0xe0] sm:$0xf]
      %v249 = vld [vmem:[%s179 + $0xe4] sm:$0xf]
      %v250 = vld [vmem:[%s179 + $0xe8] sm:$0xf]
      %v251 = vld [vmem:[%s179 + $0xec] sm:$0xf]
      %v252 = vld [vmem:[%s179 + $0xf0] sm:$0xf]
      %v253 = vld [vmem:[%s179 + $0xf4] sm:$0xf]
      %v254 = vld [vmem:[%s179 + $0xf8] sm:$0xf]
      %v255 = vld [vmem:[%s179 + $0xfc] sm:$0xf]
      %v256 = vld [vmem:[%s184] sm:$0xf]
      %v321 = vunpack.c.l.b16 %v192
      %v322 = vunpack.c.l.b16 %v193
      %v323 = vunpack.c.l.b16 %v194
      %v324 = vunpack.c.l.b16 %v195
      %v325 = vunpack.c.l.b16 %v196
      %v326 = vunpack.c.l.b16 %v197
      %v327 = vunpack.c.l.b16 %v198
      %v328 = vunpack.c.l.b16 %v199
      %v329 = vunpack.c.l.b16 %v200
      %v330 = vunpack.c.l.b16 %v201
      %v331 = vunpack.c.l.b16 %v202
      %v332 = vunpack.c.l.b16 %v203
      %v333 = vunpack.c.l.b16 %v204
      %v334 = vunpack.c.l.b16 %v205
      %v335 = vunpack.c.l.b16 %v206
      %v336 = vunpack.c.l.b16 %v207
      %v337 = vunpack.c.l.b16 %v208
      %v338 = vunpack.c.l.b16 %v209
      %v339 = vunpack.c.l.b16 %v210
      %v340 = vunpack.c.l.b16 %v211
      %v341 = vunpack.c.l.b16 %v212
      %v342 = vunpack.c.l.b16 %v213
      %v343 = vunpack.c.l.b16 %v214
      %v344 = vunpack.c.l.b16 %v215
      %v345 = vunpack.c.l.b16 %v216
      %v346 = vunpack.c.l.b16 %v217
      %v347 = vunpack.c.l.b16 %v218
      %v348 = vunpack.c.l.b16 %v219
      %v349 = vunpack.c.l.b16 %v220
      %v350 = vunpack.c.l.b16 %v221
      %v351 = vunpack.c.l.b16 %v222
      %v352 = vunpack.c.l.b16 %v223
      %v353 = vunpack.c.l.b16 %v224
      %v354 = vunpack.c.l.b16 %v225
      %v355 = vunpack.c.l.b16 %v226
      %v356 = vunpack.c.l.b16 %v227
      %v357 = vunpack.c.l.b16 %v228
      %v358 = vunpack.c.l.b16 %v229
      %v359 = vunpack.c.l.b16 %v230
      %v360 = vunpack.c.l.b16 %v231
      %v361 = vunpack.c.l.b16 %v232
      %v362 = vunpack.c.l.b16 %v233
      %v363 = vunpack.c.l.b16 %v234
      %v364 = vunpack.c.l.b16 %v235
      %v365 = vunpack.c.l.b16 %v236
      %v366 = vunpack.c.l.b16 %v237
      %v367 = vunpack.c.l.b16 %v238
      %v368 = vunpack.c.l.b16 %v239
      %v369 = vunpack.c.l.b16 %v240
      %v370 = vunpack.c.l.b16 %v241
      %v371 = vunpack.c.l.b16 %v242
      %v372 = vunpack.c.l.b16 %v243
      %v373 = vunpack.c.l.b16 %v244
      %v374 = vunpack.c.l.b16 %v245
      %v375 = vunpack.c.l.b16 %v246
      %v376 = vunpack.c.l.b16 %v247
      %v377 = vunpack.c.l.b16 %v248
      %v378 = vunpack.c.l.b16 %v249
      %v379 = vunpack.c.l.b16 %v250
      %v380 = vunpack.c.l.b16 %v251
      %v381 = vunpack.c.l.b16 %v252
      %v382 = vunpack.c.l.b16 %v253
      %v383 = vunpack.c.l.b16 %v254
      %v384 = vunpack.c.l.b16 %v255
      %v385 = vpack.c.b16 %v322, %v321
      %v386 = vpack.c.b16 %v324, %v323
      %v387 = vpack.c.b16 %v326, %v325
      %v388 = vpack.c.b16 %v328, %v327
      %v389 = vpack.c.b16 %v330, %v329
      %v390 = vpack.c.b16 %v332, %v331
      %v391 = vpack.c.b16 %v334, %v333
      %v392 = vpack.c.b16 %v336, %v335
      %v393 = vpack.c.b16 %v338, %v337
      %v394 = vpack.c.b16 %v340, %v339
      %v395 = vpack.c.b16 %v342, %v341
      %v396 = vpack.c.b16 %v344, %v343
      %v397 = vpack.c.b16 %v346, %v345
      %v398 = vpack.c.b16 %v348, %v347
      %v399 = vpack.c.b16 %v350, %v349
      %v400 = vpack.c.b16 %v352, %v351
      %v401 = vpack.c.b16 %v354, %v353
      %v402 = vpack.c.b16 %v356, %v355
      %v403 = vpack.c.b16 %v358, %v357
      %v404 = vpack.c.b16 %v360, %v359
      %v405 = vpack.c.b16 %v362, %v361
      %v406 = vpack.c.b16 %v364, %v363
      %v407 = vpack.c.b16 %v366, %v365
      %v408 = vpack.c.b16 %v368, %v367
      %v409 = vpack.c.b16 %v370, %v369
      %v410 = vpack.c.b16 %v372, %v371
      %v411 = vpack.c.b16 %v374, %v373
      %v412 = vpack.c.b16 %v376, %v375
      %v413 = vpack.c.b16 %v378, %v377
      %v414 = vpack.c.b16 %v380, %v379
      %v415 = vpack.c.b16 %v382, %v381
      %v416 = vpack.c.b16 %v384, %v383
      %v418 = vperm.slane %v256, 0
      %v419 = vperm.slane %v256, 1
      %v420 = vperm.slane %v256, 2
      %v421 = vperm.slane %v256, 3
      %vm426 = vcmask 261120
      %v428 = vsel %vm426, %v191, 0
      %v431 = vsel %vm426, %v385, 0
      %v434 = vsel %vm426, %v386, 0
      %v437 = vsel %vm426, %v387, 0
      %v440 = vsel %vm426, %v388, 0
      %v443 = vsel %vm426, %v389, 0
      %v446 = vsel %vm426, %v390, 0
      %v449 = vsel %vm426, %v391, 0
      %v452 = vsel %vm426, %v392, 0
      %v455 = vsel %vm426, %v393, 0
      %v458 = vsel %vm426, %v394, 0
      %v461 = vsel %vm426, %v395, 0
      %v464 = vsel %vm426, %v396, 0
      %v467 = vsel %vm426, %v397, 0
      %v470 = vsel %vm426, %v398, 0
      %v473 = vsel %vm426, %v399, 0
      %v476 = vsel %vm426, %v400, 0
      %v479 = vsel %vm426, %v401, 0
      %v482 = vsel %vm426, %v402, 0
      %v485 = vsel %vm426, %v403, 0
      %v488 = vsel %vm426, %v404, 0
      %v491 = vsel %vm426, %v405, 0
      %v494 = vsel %vm426, %v406, 0
      %v497 = vsel %vm426, %v407, 0
      %v500 = vsel %vm426, %v408, 0
      %v503 = vsel %vm426, %v409, 0
      %v506 = vsel %vm426, %v410, 0
      %v509 = vsel %vm426, %v411, 0
      %v512 = vsel %vm426, %v412, 0
      %v515 = vsel %vm426, %v413, 0
      %v518 = vsel %vm426, %v414, 0
      %v521 = vsel %vm426, %v415, 0
      %v524 = vsel %vm426, %v416, 0
      %526 = vmatpush.bf16.xpose.msra.mxu0 %v452
      %527 = vmatpush.bf16.xpose.msra.mxu0 %v449
      %528 = vmatpush.bf16.xpose.msra.mxu0 %v446
      %529 = vmatpush.bf16.xpose.msra.mxu0 %v443
      %530 = vmatpush.bf16.xpose.msra.mxu0 %v440
      %531 = vmatpush.bf16.xpose.msra.mxu0 %v437
      %532 = vmatpush.bf16.xpose.msra.mxu0 %v434
      %533 = vmatpush.bf16.xpose.msra.mxu0 %v431
      %534 = vmatmul.bf16.gmra.mxu0 %v428
      %v535 = vpop.f32.mrf.mxu0
      %v536 = vadd.f32 %v418, %v535
      %v537 = vpop.f32.mrf.mxu0
      %538 = vdwg.mxu0
      %539 = vmatpush.bf16.xpose.msra.mxu0 %v476
      %540 = vmatpush.bf16.xpose.msra.mxu0 %v473
      %541 = vmatpush.bf16.xpose.msra.mxu0 %v470
      %542 = vmatpush.bf16.xpose.msra.mxu0 %v467
      %543 = vmatpush.bf16.xpose.msra.mxu0 %v464
      %544 = vmatpush.bf16.xpose.msra.mxu0 %v461
      %545 = vmatpush.bf16.xpose.msra.mxu0 %v458
      %546 = vmatpush.bf16.xpose.msra.mxu0 %v455
      %547 = vmatmul.bf16.gmra.mxu0 %v428
      %v548 = vpop.f32.mrf.mxu0
      %v549 = vadd.f32 %v419, %v548
      %v550 = vpop.f32.mrf.mxu0
      %551 = vdwg.mxu0
      %552 = vmatpush.bf16.xpose.msra.mxu0 %v500
      %553 = vmatpush.bf16.xpose.msra.mxu0 %v497
      %554 = vmatpush.bf16.xpose.msra.mxu0 %v494
      %555 = vmatpush.bf16.xpose.msra.mxu0 %v491
      %556 = vmatpush.bf16.xpose.msra.mxu0 %v488
      %557 = vmatpush.bf16.xpose.msra.mxu0 %v485
      %558 = vmatpush.bf16.xpose.msra.mxu0 %v482
      %559 = vmatpush.bf16.xpose.msra.mxu0 %v479
      %560 = vmatmul.bf16.gmra.mxu0 %v428
      %v561 = vpop.f32.mrf.mxu0
      %v562 = vadd.f32 %v420, %v561
      %v563 = vpop.f32.mrf.mxu0
      %564 = vdwg.mxu0
      %565 = vmatpush.bf16.xpose.msra.mxu0 %v524
      %566 = vmatpush.bf16.xpose.msra.mxu0 %v521
      %567 = vmatpush.bf16.xpose.msra.mxu0 %v518
      %568 = vmatpush.bf16.xpose.msra.mxu0 %v515
      %569 = vmatpush.bf16.xpose.msra.mxu0 %v512
      %570 = vmatpush.bf16.xpose.msra.mxu0 %v509
      %571 = vmatpush.bf16.xpose.msra.mxu0 %v506
      %572 = vmatpush.bf16.xpose.msra.mxu0 %v503
      %573 = vmatmul.bf16.gmra.mxu0 %v428
      %v574 = vpop.f32.mrf.mxu0
      %v575 = vadd.f32 %v421, %v574
      %v576 = vpop.f32.mrf.mxu0
      %577 = vdwg.mxu0
      %v582 = vrot.slane %v549, 7
      %v583 = vrot.slane %v562, 6
      %v584 = vrot.slane %v575, 5
      %vm585 = vcmask 1040384
      %v586 = vsel %vm585, %v536, %v582
      %vm587 = vcmask 1042434
      %v588 = vsel %vm587, %v583, %v584
      %vm589 = vcmask 1041408
      %v590 = vsel %vm589, %v586, %v588
      %v592 = vlaneseq
      %vm593 = vcmp.ge.s32.totalorder %v592, 0
      %vm594 = vcmp.lt.s32.totalorder %v592, 512
      %vm595 = vmand %vm593, %vm594
      %596 = vst.msk [vmem:[%s189] sm:$0xf] %vm595, %v590
      %s597 = smul.u32 4, %s14
      %p598 = scmp.lt.s32.totalorder %s597, 7
      %s599 = scalar_select %p598, %s597, 7
      %s600 = scalar_lea.vmem %s3, %s599
      // Predicated region
      $region33: #{mat_gru_cell_forward.2} parent=31 // pred_check
        %p601 = pneg %p105
      $region34: #{mat_gru_cell_forward.2} parent=31 // pred_check_branch
        %603 = sbr.rel (%p601) target = $region36
      $region35: #{mat_gru_cell_forward.2} parent=31 // pred_region
        %s604 = smul.u32 4, %s14
      $region36: #{mat_gru_cell_forward.2} parent=31 // pred_fallthru
        _
    $region32: #{mat_gru_cell_forward.2} parent=5 // pred_fallthru
      _
    %p605 = scmp.le.s32.totalorder 2, %s9
    // Predicated region
    $region37: #{mat_gru_cell_forward.2} parent=5 // pred_check
      %p606 = pneg %p605
    $region38: #{mat_gru_cell_forward.2} parent=5 // pred_check_branch
      %608 = sbr.rel (%p606) target = $region40
    $region39: #{mat_gru_cell_forward.2} parent=5 // pred_region
      %s609 = ssub.s32 %s9, 2
      // Predicated region
      $region41: #{mat_gru_cell_forward.2} parent=39 // pred_check
        %p610 = pneg %p111
      $region42: #{mat_gru_cell_forward.2} parent=39 // pred_check_branch
        %612 = sbr.rel (%p610) target = $region44
      $region43: #{mat_gru_cell_forward.2} parent=39 // pred_region
        %s613 = smul.u32 4, %s15
        %p614 = scmp.lt.s32.totalorder %s613, 7
        %s615 = scalar_select %p614, %s613, 7
        %s616 = scalar_lea.vmem %s3, %s615
      $region44: #{mat_gru_cell_forward.2} parent=39 // pred_fallthru
        _
    $region40: #{mat_gru_cell_forward.2} parent=5 // pred_fallthru
      _
  $region6: #{mat_gru_cell_forward.2} parent=0 // loop_footer
    %s13 = sadd.s32 1, %s9
  $region7: #{mat_gru_cell_forward.2} parent=0 // loop_footer_branch
    %8 = sbr.rel target = $region3
  $region8: #{mat_gru_cell_forward.2} parent=0 // loop_exit
    _

// kernel: mat_gru_cell_forward.3
$region0: #{mat_gru_cell_forward.3}
  #allocation0 [shape = 'u32[]', space=smem, size = 0x4, offset = 0x4, fixed_abs, tag = 'smem constant byte address 0x4 - core index']
  #allocation1 [shape = 'u32[72,128]{1,0:T(1,128)}', space=vmem, size = 0x9000, scoped, tag = 'internal scratch']
  #allocation2 [shape = 'f32[8,32]{1,0:T(8,128)}', space=vmem, size = 0x1000, scoped, tag = 'scratch operand']
  #allocation3 [shape = 's32[1]{0}', space=sflag, size = 0x4, scoped, tag = 'scratch operand']
  #allocation4 [shape = 's32[1]{0}', space=sflag, size = 0x4, scoped, tag = 'scoped memory for mat_gru_cell_forward.3']
  #allocation5 [shape = 'u8[512]{0}', space=smem, size = 0x200, scoped, tag = 'prefetched SMEM operand 0']
  #allocation8 [shape = 's32[]', space=sflag, size = 0x4, offset = 0, fixed_abs, tag = 'sflag constant byte address 0x0 - dummy sync flag']
  #allocation9 [shape = 's32[]', space=sflag, size = 0x4, offset = 0, fixed_abs, tag = 'sflag constant byte address 0x0 - dummy sync flag']
  #allocation10 [shape = 's32[]', space=sflag, size = 0x4, offset = 0, fixed_abs, tag = 'sflag constant byte address 0x0 - dummy sync flag']
  #allocation11 [shape = 's32[]', space=sflag, size = 0x4, offset = 0, fixed_abs, tag = 'sflag constant byte address 0x0 - dummy sync flag']
  #allocation12 [shape = 's32[]', space=sflag, size = 0x4, offset = 0, fixed_abs, tag = 'sflag constant byte address 0x0 - dummy sync flag']
  #allocation13 [shape = 's32[]', space=sflag, size = 0x4, offset = 0, fixed_abs, tag = 'sflag constant byte address 0x0 - dummy sync flag']
  #allocation14 [shape = 's32[]', space=sflag, size = 0x4, offset = 0, fixed_abs, tag = 'sflag constant byte address 0x0 - dummy sync flag']
  #allocation15 [shape = 's32[]', space=sflag, size = 0x4, offset = 0, fixed_abs, tag = 'sflag constant byte address 0x0 - dummy sync flag']
  %s0 = inlined_call_operand.vmem [shape: s32[8], index: 0, kind: input, shape index: {}]
  %s1 = inlined_call_operand.vmem [shape: f32[8,1], index: 1, kind: input, shape index: {}]
  %s2 = inlined_call_operand.vmem [shape: f32[8,32], index: 2, kind: input, shape index: {}]
  %s3 = inlined_call_operand.vmem [shape: f32[32,96], index: 3, kind: input, shape index: {}]
  %s4 = inlined_call_operand.vmem [shape: f32[32,64], index: 4, kind: input, shape index: {}]
  %s5 = inlined_call_operand.vmem [shape: f32[32,32], index: 5, kind: input, shape index: {}]
  %s6 = inlined_call_operand.vmem [shape: f32[8,96], index: 6, kind: input, shape index: {}]
  %s7 = inlined_call_operand.vmem [shape: f32[1024,32], index: 7, kind: input, shape index: {}]
  %s8 = inlined_call_operand.hbm [shape: f32[8,32], index: 8, kind: output, shape index: {}]
  %s9 = sld [smem:[#allocation0]]
  $region274: #{mat_gru_cell_forward.3} parent=0
    _
  %s11 = ssub.s32 1, %s9
  %s12 = scalar_select 0, %s11, %s9
  %s14 = sshll.u32 %s0, 4
  %s15 = int_to_ptr.vmem [resolvable:$true] %s14
  %17 = dma.vmem_to_smem %s15, 16, [#allocation5], [#allocation4]
  %19 = dma.done [#allocation4], 16
  %20 = sfence
  $region1: #{mat_gru_cell_forward.3} parent=0
    #allocation6 [shape = 'u8[4096]{0}', space=vmem, size = 0x1000, scoped, tag = 'output window, operand 0, single buffered']
    #allocation7 [shape = 's32[1]{0}', space=sflag, size = 0x4, scoped, tag = 'scoped memory for mat_gru_cell_forward.3']
    %21 = vsyncpa [#allocation7], 0
    // Predicated region
    $region2: #{mat_gru_cell_forward.3} parent=1 // pred_check
      _
    $region3: #{mat_gru_cell_forward.3} parent=1 // pred_check_branch
      %23 = sbr.rel (0) target = $region5
    $region4: #{mat_gru_cell_forward.3} parent=1 // pred_region
      _
    $region5: #{mat_gru_cell_forward.3} parent=1 // pred_fallthru
      _
    // Predicated region
    $region6: #{mat_gru_cell_forward.3} parent=1 // pred_check
      _
    $region7: #{mat_gru_cell_forward.3} parent=1 // pred_check_branch
      %25 = sbr.rel (0) target = $region9
    $region8: #{mat_gru_cell_forward.3} parent=1 // pred_region
      _
    $region9: #{mat_gru_cell_forward.3} parent=1 // pred_fallthru
      _
    // Predicated region
    $region10: #{mat_gru_cell_forward.3} parent=1 // pred_check
      _
    $region11: #{mat_gru_cell_forward.3} parent=1 // pred_check_branch
      %27 = sbr.rel (0) target = $region13
    $region12: #{mat_gru_cell_forward.3} parent=1 // pred_region
      _
    $region13: #{mat_gru_cell_forward.3} parent=1 // pred_fallthru
      _
    // Predicated region
    $region14: #{mat_gru_cell_forward.3} parent=1 // pred_check
      _
    $region15: #{mat_gru_cell_forward.3} parent=1 // pred_check_branch
      %29 = sbr.rel (0) target = $region17
    $region16: #{mat_gru_cell_forward.3} parent=1 // pred_region
      _
    $region17: #{mat_gru_cell_forward.3} parent=1 // pred_fallthru
      _
    // Predicated region
    $region18: #{mat_gru_cell_forward.3} parent=1 // pred_check
      _
    $region19: #{mat_gru_cell_forward.3} parent=1 // pred_check_branch
      %31 = sbr.rel (0) target = $region21
    $region20: #{mat_gru_cell_forward.3} parent=1 // pred_region
      _
    $region21: #{mat_gru_cell_forward.3} parent=1 // pred_fallthru
      _
    // Predicated region
    $region22: #{mat_gru_cell_forward.3} parent=1 // pred_check
      _
    $region23: #{mat_gru_cell_forward.3} parent=1 // pred_check_branch
      %33 = sbr.rel (0) target = $region25
    $region24: #{mat_gru_cell_forward.3} parent=1 // pred_region
      _
    $region25: #{mat_gru_cell_forward.3} parent=1 // pred_fallthru
      _
    %s34 = sld [smem:[#allocation5]]
    %s35 = scalar_lea.vmem %s7, %s34
    // Predicated region
    $region26: #{mat_gru_cell_forward.3} parent=1 // pred_check
      _
    $region27: #{mat_gru_cell_forward.3} parent=1 // pred_check_branch
      %37 = sbr.rel target = $region29
    $region28: #{mat_gru_cell_forward.3} parent=1 // pred_region
      // Predicated region
      $region41: #{mat_gru_cell_forward.3} parent=28 // pred_check
        _
      $region42: #{mat_gru_cell_forward.3} parent=28 // pred_check_branch
        %53 = sbr.rel (0) target = $region44
      $region43: #{mat_gru_cell_forward.3} parent=28 // pred_region
        %s55 = ssub.s32 2, 1
        loop: start=0, step=1, limit=1
        $region45: #{mat_gru_cell_forward.3} parent=43 // loop_pre_header
          _
        $region46: #{mat_gru_cell_forward.3} parent=43 // loop_header
          %s57 = sphi 0, %s61
          %p58 = scmp.ge.s32.totalorder %s57, 1
          %s62 = sphi %s35, %s35
          %s63 = sphi [#allocation2], [#allocation2]
        $region47: #{mat_gru_cell_forward.3} parent=43 // loop_header_branch
          %60 = sbr.rel (%p58) target = $region51
        $region48: #{mat_gru_cell_forward.3} parent=43 // loop_body
          %v64 = vld [vmem:[%s62] sm:%s55]
          %65 = vst [vmem:[%s63] sm:%s55] %v64
        $region49: #{mat_gru_cell_forward.3} parent=43 // loop_footer
          %s61 = sadd.s32 1, %s57
        $region50: #{mat_gru_cell_forward.3} parent=43 // loop_footer_branch
          %56 = sbr.rel target = $region46
        $region51: #{mat_gru_cell_forward.3} parent=43 // loop_exit
          _
      $region44: #{mat_gru_cell_forward.3} parent=28 // pred_fallthru
        _
    $region29: #{mat_gru_cell_forward.3} parent=1 // pred_fallthru
      _
    // Predicated region
    $region30: #{mat_gru_cell_forward.3} parent=1 // pred_check
      _
    $region31: #{mat_gru_cell_forward.3} parent=1 // pred_check_branch
      %39 = sbr.rel (0) target = $region33
    $region32: #{mat_gru_cell_forward.3} parent=1 // pred_region
      %s41 = ssub.s32 2, 1
      loop: start=0, step=1, limit=1
      $region34: #{mat_gru_cell_forward.3} parent=32 // loop_pre_header
        _
      $region35: #{mat_gru_cell_forward.3} parent=32 // loop_header
        %s43 = sphi 0, %s47
        %p44 = scmp.ge.s32.totalorder %s43, 1
        %s48 = sphi %s35, %s35
        %s49 = sphi [#allocation2], [#allocation2]
      $region36: #{mat_gru_cell_forward.3} parent=32 // loop_header_branch
        %46 = sbr.rel (%p44) target = $region40
      $region37: #{mat_gru_cell_forward.3} parent=32 // loop_body
        %v50 = vld [vmem:[%s48] sm:%s41]
        %51 = vst [vmem:[%s49] sm:%s41] %v50
      $region38: #{mat_gru_cell_forward.3} parent=32 // loop_footer
        %s47 = sadd.s32 1, %s43
      $region39: #{mat_gru_cell_forward.3} parent=32 // loop_footer_branch
        %42 = sbr.rel target = $region35
      $region40: #{mat_gru_cell_forward.3} parent=32 // loop_exit
        _
    $region33: #{mat_gru_cell_forward.3} parent=1 // pred_fallthru
      _
    // Predicated region
    $region52: #{mat_gru_cell_forward.3} parent=1 // pred_check
      _
    $region53: #{mat_gru_cell_forward.3} parent=1 // pred_check_branch
      %68 = sbr.rel (0) target = $region55
    $region54: #{mat_gru_cell_forward.3} parent=1 // pred_region
      %69 = vsyncadd [#allocation3], 16
    $region55: #{mat_gru_cell_forward.3} parent=1 // pred_fallthru
      _
    %s70 = sld [smem:[#allocation5 + $0x1]]
    %s71 = scalar_lea.vmem %s7, %s70
    %s72 = scalar_lea.vmem [#allocation2], 1
    // Predicated region
    $region56: #{mat_gru_cell_forward.3} parent=1 // pred_check
      _
    $region57: #{mat_gru_cell_forward.3} parent=1 // pred_check_branch
      %74 = sbr.rel target = $region59
    $region58: #{mat_gru_cell_forward.3} parent=1 // pred_region
      // Predicated region
      $region71: #{mat_gru_cell_forward.3} parent=58 // pred_check
        _
      $region72: #{mat_gru_cell_forward.3} parent=58 // pred_check_branch
        %90 = sbr.rel (0) target = $region74
      $region73: #{mat_gru_cell_forward.3} parent=58 // pred_region
        %s92 = ssub.s32 2, 1
        loop: start=0, step=1, limit=1
        $region75: #{mat_gru_cell_forward.3} parent=73 // loop_pre_header
          _
        $region76: #{mat_gru_cell_forward.3} parent=73 // loop_header
          %s94 = sphi 0, %s98
          %p95 = scmp.ge.s32.totalorder %s94, 1
          %s99 = sphi %s71, %s71
          %s100 = sphi %s72, %s72
        $region77: #{mat_gru_cell_forward.3} parent=73 // loop_header_branch
          %97 = sbr.rel (%p95) target = $region81
        $region78: #{mat_gru_cell_forward.3} parent=73 // loop_body
          %v101 = vld [vmem:[%s99] sm:%s92]
          %102 = vst [vmem:[%s100] sm:%s92] %v101
        $region79: #{mat_gru_cell_forward.3} parent=73 // loop_footer
          %s98 = sadd.s32 1, %s94
        $region80: #{mat_gru_cell_forward.3} parent=73 // loop_footer_branch
          %93 = sbr.rel target = $region76
        $region81: #{mat_gru_cell_forward.3} parent=73 // loop_exit
          _
      $region74: #{mat_gru_cell_forward.3} parent=58 // pred_fallthru
        _
    $region59: #{mat_gru_cell_forward.3} parent=1 // pred_fallthru
      _
    // Predicated region
    $region60: #{mat_gru_cell_forward.3} parent=1 // pred_check
      _
    $region61: #{mat_gru_cell_forward.3} parent=1 // pred_check_branch
      %76 = sbr.rel (0) target = $region63
    $region62: #{mat_gru_cell_forward.3} parent=1 // pred_region
      %s78 = ssub.s32 2, 1
      loop: start=0, step=1, limit=1
      $region64: #{mat_gru_cell_forward.3} parent=62 // loop_pre_header
        _
      $region65: #{mat_gru_cell_forward.3} parent=62 // loop_header
        %s80 = sphi 0, %s84
        %p81 = scmp.ge.s32.totalorder %s80, 1
        %s85 = sphi %s71, %s71
        %s86 = sphi %s72, %s72
      $region66: #{mat_gru_cell_forward.3} parent=62 // loop_header_branch
        %83 = sbr.rel (%p81) target = $region70
      $region67: #{mat_gru_cell_forward.3} parent=62 // loop_body
        %v87 = vld [vmem:[%s85] sm:%s78]
        %88 = vst [vmem:[%s86] sm:%s78] %v87
      $region68: #{mat_gru_cell_forward.3} parent=62 // loop_footer
        %s84 = sadd.s32 1, %s80
      $region69: #{mat_gru_cell_forward.3} parent=62 // loop_footer_branch
        %79 = sbr.rel target = $region65
      $region70: #{mat_gru_cell_forward.3} parent=62 // loop_exit
        _
    $region63: #{mat_gru_cell_forward.3} parent=1 // pred_fallthru
      _
    // Predicated region
    $region82: #{mat_gru_cell_forward.3} parent=1 // pred_check
      _
    $region83: #{mat_gru_cell_forward.3} parent=1 // pred_check_branch
      %105 = sbr.rel (0) target = $region85
    $region84: #{mat_gru_cell_forward.3} parent=1 // pred_region
      %106 = vsyncadd [#allocation3], 16
    $region85: #{mat_gru_cell_forward.3} parent=1 // pred_fallthru
      _
    %s107 = sld [smem:[#allocation5 + $0x2]]
    %s108 = scalar_lea.vmem %s7, %s107
    %s109 = scalar_lea.vmem [#allocation2], 2
    // Predicated region
    $region86: #{mat_gru_cell_forward.3} parent=1 // pred_check
      _
    $region87: #{mat_gru_cell_forward.3} parent=1 // pred_check_branch
      %111 = sbr.rel target = $region89
    $region88: #{mat_gru_cell_forward.3} parent=1 // pred_region
      // Predicated region
      $region101: #{mat_gru_cell_forward.3} parent=88 // pred_check
        _
      $region102: #{mat_gru_cell_forward.3} parent=88 // pred_check_branch
        %127 = sbr.rel (0) target = $region104
      $region103: #{mat_gru_cell_forward.3} parent=88 // pred_region
        %s129 = ssub.s32 2, 1
        loop: start=0, step=1, limit=1
        $region105: #{mat_gru_cell_forward.3} parent=103 // loop_pre_header
          _
        $region106: #{mat_gru_cell_forward.3} parent=103 // loop_header
          %s131 = sphi 0, %s135
          %p132 = scmp.ge.s32.totalorder %s131, 1
          %s136 = sphi %s108, %s108
          %s137 = sphi %s109, %s109
        $region107: #{mat_gru_cell_forward.3} parent=103 // loop_header_branch
          %134 = sbr.rel (%p132) target = $region111
        $region108: #{mat_gru_cell_forward.3} parent=103 // loop_body
          %v138 = vld [vmem:[%s136] sm:%s129]
          %139 = vst [vmem:[%s137] sm:%s129] %v138
        $region109: #{mat_gru_cell_forward.3} parent=103 // loop_footer
          %s135 = sadd.s32 1, %s131
        $region110: #{mat_gru_cell_forward.3} parent=103 // loop_footer_branch
          %130 = sbr.rel target = $region106
        $region111: #{mat_gru_cell_forward.3} parent=103 // loop_exit
          _
      $region104: #{mat_gru_cell_forward.3} parent=88 // pred_fallthru
        _
    $region89: #{mat_gru_cell_forward.3} parent=1 // pred_fallthru
      _
    // Predicated region
    $region90: #{mat_gru_cell_forward.3} parent=1 // pred_check
      _
    $region91: #{mat_gru_cell_forward.3} parent=1 // pred_check_branch
      %113 = sbr.rel (0) target = $region93
    $region92: #{mat_gru_cell_forward.3} parent=1 // pred_region
      %s115 = ssub.s32 2, 1
      loop: start=0, step=1, limit=1
      $region94: #{mat_gru_cell_forward.3} parent=92 // loop_pre_header
        _
      $region95: #{mat_gru_cell_forward.3} parent=92 // loop_header
        %s117 = sphi 0, %s121
        %p118 = scmp.ge.s32.totalorder %s117, 1
        %s122 = sphi %s108, %s108
        %s123 = sphi %s109, %s109
      $region96: #{mat_gru_cell_forward.3} parent=92 // loop_header_branch
        %120 = sbr.rel (%p118) target = $region100
      $region97: #{mat_gru_cell_forward.3} parent=92 // loop_body
        %v124 = vld [vmem:[%s122] sm:%s115]
        %125 = vst [vmem:[%s123] sm:%s115] %v124
      $region98: #{mat_gru_cell_forward.3} parent=92 // loop_footer
        %s121 = sadd.s32 1, %s117
      $region99: #{mat_gru_cell_forward.3} parent=92 // loop_footer_branch
        %116 = sbr.rel target = $region95
      $region100: #{mat_gru_cell_forward.3} parent=92 // loop_exit
        _
    $region93: #{mat_gru_cell_forward.3} parent=1 // pred_fallthru
      _
    // Predicated region
    $region112: #{mat_gru_cell_forward.3} parent=1 // pred_check
      _
    $region113: #{mat_gru_cell_forward.3} parent=1 // pred_check_branch
      %142 = sbr.rel (0) target = $region115
    $region114: #{mat_gru_cell_forward.3} parent=1 // pred_region
      %143 = vsyncadd [#allocation3], 16
    $region115: #{mat_gru_cell_forward.3} parent=1 // pred_fallthru
      _
    %s144 = sld [smem:[#allocation5 + $0x3]]
    %s145 = scalar_lea.vmem %s7, %s144
    %s146 = scalar_lea.vmem [#allocation2], 3
    // Predicated region
    $region116: #{mat_gru_cell_forward.3} parent=1 // pred_check
      _
    $region117: #{mat_gru_cell_forward.3} parent=1 // pred_check_branch
      %148 = sbr.rel target = $region119
    $region118: #{mat_gru_cell_forward.3} parent=1 // pred_region
      // Predicated region
      $region131: #{mat_gru_cell_forward.3} parent=118 // pred_check
        _
      $region132: #{mat_gru_cell_forward.3} parent=118 // pred_check_branch
        %164 = sbr.rel (0) target = $region134
      $region133: #{mat_gru_cell_forward.3} parent=118 // pred_region
        %s166 = ssub.s32 2, 1
        loop: start=0, step=1, limit=1
        $region135: #{mat_gru_cell_forward.3} parent=133 // loop_pre_header
          _
        $region136: #{mat_gru_cell_forward.3} parent=133 // loop_header
          %s168 = sphi 0, %s172
          %p169 = scmp.ge.s32.totalorder %s168, 1
          %s173 = sphi %s145, %s145
          %s174 = sphi %s146, %s146
        $region137: #{mat_gru_cell_forward.3} parent=133 // loop_header_branch
          %171 = sbr.rel (%p169) target = $region141
        $region138: #{mat_gru_cell_forward.3} parent=133 // loop_body
          %v175 = vld [vmem:[%s173] sm:%s166]
          %176 = vst [vmem:[%s174] sm:%s166] %v175
        $region139: #{mat_gru_cell_forward.3} parent=133 // loop_footer
          %s172 = sadd.s32 1, %s168
        $region140: #{mat_gru_cell_forward.3} parent=133 // loop_footer_branch
          %167 = sbr.rel target = $region136
        $region141: #{mat_gru_cell_forward.3} parent=133 // loop_exit
          _
      $region134: #{mat_gru_cell_forward.3} parent=118 // pred_fallthru
        _
    $region119: #{mat_gru_cell_forward.3} parent=1 // pred_fallthru
      _
    // Predicated region
    $region120: #{mat_gru_cell_forward.3} parent=1 // pred_check
      _
    $region121: #{mat_gru_cell_forward.3} parent=1 // pred_check_branch
      %150 = sbr.rel (0) target = $region123
    $region122: #{mat_gru_cell_forward.3} parent=1 // pred_region
      %s152 = ssub.s32 2, 1
      loop: start=0, step=1, limit=1
      $region124: #{mat_gru_cell_forward.3} parent=122 // loop_pre_header
        _
      $region125: #{mat_gru_cell_forward.3} parent=122 // loop_header
        %s154 = sphi 0, %s158
        %p155 = scmp.ge.s32.totalorder %s154, 1
        %s159 = sphi %s145, %s145
        %s160 = sphi %s146, %s146
      $region126: #{mat_gru_cell_forward.3} parent=122 // loop_header_branch
        %157 = sbr.rel (%p155) target = $region130
      $region127: #{mat_gru_cell_forward.3} parent=122 // loop_body
        %v161 = vld [vmem:[%s159] sm:%s152]
        %162 = vst [vmem:[%s160] sm:%s152] %v161
      $region128: #{mat_gru_cell_forward.3} parent=122 // loop_footer
        %s158 = sadd.s32 1, %s154
      $region129: #{mat_gru_cell_forward.3} parent=122 // loop_footer_branch
        %153 = sbr.rel target = $region125
      $region130: #{mat_gru_cell_forward.3} parent=122 // loop_exit
        _
    $region123: #{mat_gru_cell_forward.3} parent=1 // pred_fallthru
      _
    // Predicated region
    $region142: #{mat_gru_cell_forward.3} parent=1 // pred_check
      _
    $region143: #{mat_gru_cell_forward.3} parent=1 // pred_check_branch
      %179 = sbr.rel (0) target = $region145
    $region144: #{mat_gru_cell_forward.3} parent=1 // pred_region
      %180 = vsyncadd [#allocation3], 16
    $region145: #{mat_gru_cell_forward.3} parent=1 // pred_fallthru
      _
    %s181 = sld [smem:[#allocation5 + $0x4]]
    %s182 = scalar_lea.vmem %s7, %s181
    %s183 = scalar_lea.vmem [#allocation2], 4
    // Predicated region
    $region146: #{mat_gru_cell_forward.3} parent=1 // pred_check
      _
    $region147: #{mat_gru_cell_forward.3} parent=1 // pred_check_branch
      %185 = sbr.rel target = $region149
    $region148: #{mat_gru_cell_forward.3} parent=1 // pred_region
      // Predicated region
      $region161: #{mat_gru_cell_forward.3} parent=148 // pred_check
        _
      $region162: #{mat_gru_cell_forward.3} parent=148 // pred_check_branch
        %201 = sbr.rel (0) target = $region164
      $region163: #{mat_gru_cell_forward.3} parent=148 // pred_region
        %s203 = ssub.s32 2, 1
        loop: start=0, step=1, limit=1
        $region165: #{mat_gru_cell_forward.3} parent=163 // loop_pre_header
          _
        $region166: #{mat_gru_cell_forward.3} parent=163 // loop_header
          %s205 = sphi 0, %s209
          %p206 = scmp.ge.s32.totalorder %s205, 1
          %s210 = sphi %s182, %s182
          %s211 = sphi %s183, %s183
        $region167: #{mat_gru_cell_forward.3} parent=163 // loop_header_branch
          %208 = sbr.rel (%p206) target = $region171
        $region168: #{mat_gru_cell_forward.3} parent=163 // loop_body
          %v212 = vld [vmem:[%s210] sm:%s203]
          %213 = vst [vmem:[%s211] sm:%s203] %v212
        $region169: #{mat_gru_cell_forward.3} parent=163 // loop_footer
          %s209 = sadd.s32 1, %s205
        $region170: #{mat_gru_cell_forward.3} parent=163 // loop_footer_branch
          %204 = sbr.rel target = $region166
        $region171: #{mat_gru_cell_forward.3} parent=163 // loop_exit
          _
      $region164: #{mat_gru_cell_forward.3} parent=148 // pred_fallthru
        _
    $region149: #{mat_gru_cell_forward.3} parent=1 // pred_fallthru
      _
    // Predicated region
    $region150: #{mat_gru_cell_forward.3} parent=1 // pred_check
      _
    $region151: #{mat_gru_cell_forward.3} parent=1 // pred_check_branch
      %187 = sbr.rel (0) target = $region153
    $region152: #{mat_gru_cell_forward.3} parent=1 // pred_region
      %s189 = ssub.s32 2, 1
      loop: start=0, step=1, limit=1
      $region154: #{mat_gru_cell_forward.3} parent=152 // loop_pre_header
        _
      $region155: #{mat_gru_cell_forward.3} parent=152 // loop_header
        %s191 = sphi 0, %s195
        %p192 = scmp.ge.s32.totalorder %s191, 1
        %s196 = sphi %s182, %s182
        %s197 = sphi %s183, %s183
      $region156: #{mat_gru_cell_forward.3} parent=152 // loop_header_branch
        %194 = sbr.rel (%p192) target = $region160
      $region157: #{mat_gru_cell_forward.3} parent=152 // loop_body
        %v198 = vld [vmem:[%s196] sm:%s189]
        %199 = vst [vmem:[%s197] sm:%s189] %v198
      $region158: #{mat_gru_cell_forward.3} parent=152 // loop_footer
        %s195 = sadd.s32 1, %s191
      $region159: #{mat_gru_cell_forward.3} parent=152 // loop_footer_branch
        %190 = sbr.rel target = $region155
      $region160: #{mat_gru_cell_forward.3} parent=152 // loop_exit
        _
    $region153: #{mat_gru_cell_forward.3} parent=1 // pred_fallthru
      _
    // Predicated region
    $region172: #{mat_gru_cell_forward.3} parent=1 // pred_check
      _
    $region173: #{mat_gru_cell_forward.3} parent=1 // pred_check_branch
      %216 = sbr.rel (0) target = $region175
    $region174: #{mat_gru_cell_forward.3} parent=1 // pred_region
      %217 = vsyncadd [#allocation3], 16
    $region175: #{mat_gru_cell_forward.3} parent=1 // pred_fallthru
      _
    %s218 = sld [smem:[#allocation5 + $0x5]]
    %s219 = scalar_lea.vmem %s7, %s218
    %s220 = scalar_lea.vmem [#allocation2], 5
    // Predicated region
    $region176: #{mat_gru_cell_forward.3} parent=1 // pred_check
      _
    $region177: #{mat_gru_cell_forward.3} parent=1 // pred_check_branch
      %222 = sbr.rel target = $region179
    $region178: #{mat_gru_cell_forward.3} parent=1 // pred_region
      // Predicated region
      $region191: #{mat_gru_cell_forward.3} parent=178 // pred_check
        _
      $region192: #{mat_gru_cell_forward.3} parent=178 // pred_check_branch
        %238 = sbr.rel (0) target = $region194
      $region193: #{mat_gru_cell_forward.3} parent=178 // pred_region
        %s240 = ssub.s32 2, 1
        loop: start=0, step=1, limit=1
        $region195: #{mat_gru_cell_forward.3} parent=193 // loop_pre_header
          _
        $region196: #{mat_gru_cell_forward.3} parent=193 // loop_header
          %s242 = sphi 0, %s246
          %p243 = scmp.ge.s32.totalorder %s242, 1
          %s247 = sphi %s219, %s219
          %s248 = sphi %s220, %s220
        $region197: #{mat_gru_cell_forward.3} parent=193 // loop_header_branch
          %245 = sbr.rel (%p243) target = $region201
        $region198: #{mat_gru_cell_forward.3} parent=193 // loop_body
          %v249 = vld [vmem:[%s247] sm:%s240]
          %250 = vst [vmem:[%s248] sm:%s240] %v249
        $region199: #{mat_gru_cell_forward.3} parent=193 // loop_footer
          %s246 = sadd.s32 1, %s242
        $region200: #{mat_gru_cell_forward.3} parent=193 // loop_footer_branch
          %241 = sbr.rel target = $region196
        $region201: #{mat_gru_cell_forward.3} parent=193 // loop_exit
          _
      $region194: #{mat_gru_cell_forward.3} parent=178 // pred_fallthru
        _
    $region179: #{mat_gru_cell_forward.3} parent=1 // pred_fallthru
      _
    // Predicated region
    $region180: #{mat_gru_cell_forward.3} parent=1 // pred_check
      _
    $region181: #{mat_gru_cell_forward.3} parent=1 // pred_check_branch
      %224 = sbr.rel (0) target = $region183
    $region182: #{mat_gru_cell_forward.3} parent=1 // pred_region
      %s226 = ssub.s32 2, 1
      loop: start=0, step=1, limit=1
      $region184: #{mat_gru_cell_forward.3} parent=182 // loop_pre_header
        _
      $region185: #{mat_gru_cell_forward.3} parent=182 // loop_header
        %s228 = sphi 0, %s232
        %p229 = scmp.ge.s32.totalorder %s228, 1
        %s233 = sphi %s219, %s219
        %s234 = sphi %s220, %s220
      $region186: #{mat_gru_cell_forward.3} parent=182 // loop_header_branch
        %231 = sbr.rel (%p229) target = $region190
      $region187: #{mat_gru_cell_forward.3} parent=182 // loop_body
        %v235 = vld [vmem:[%s233] sm:%s226]
        %236 = vst [vmem:[%s234] sm:%s226] %v235
      $region188: #{mat_gru_cell_forward.3} parent=182 // loop_footer
        %s232 = sadd.s32 1, %s228
      $region189: #{mat_gru_cell_forward.3} parent=182 // loop_footer_branch
        %227 = sbr.rel target = $region185
      $region190: #{mat_gru_cell_forward.3} parent=182 // loop_exit
        _
    $region183: #{mat_gru_cell_forward.3} parent=1 // pred_fallthru
      _
    // Predicated region
    $region202: #{mat_gru_cell_forward.3} parent=1 // pred_check
      _
    $region203: #{mat_gru_cell_forward.3} parent=1 // pred_check_branch
      %253 = sbr.rel (0) target = $region205
    $region204: #{mat_gru_cell_forward.3} parent=1 // pred_region
      %254 = vsyncadd [#allocation3], 16
    $region205: #{mat_gru_cell_forward.3} parent=1 // pred_fallthru
      _
    %s255 = sld [smem:[#allocation5 + $0x6]]
    %s256 = scalar_lea.vmem %s7, %s255
    %s257 = scalar_lea.vmem [#allocation2], 6
    // Predicated region
    $region206: #{mat_gru_cell_forward.3} parent=1 // pred_check
      _
    $region207: #{mat_gru_cell_forward.3} parent=1 // pred_check_branch
      %259 = sbr.rel target = $region209
    $region208: #{mat_gru_cell_forward.3} parent=1 // pred_region
      // Predicated region
      $region221: #{mat_gru_cell_forward.3} parent=208 // pred_check
        _
      $region222: #{mat_gru_cell_forward.3} parent=208 // pred_check_branch
        %275 = sbr.rel (0) target = $region224
      $region223: #{mat_gru_cell_forward.3} parent=208 // pred_region
        %s277 = ssub.s32 2, 1
        loop: start=0, step=1, limit=1
        $region225: #{mat_gru_cell_forward.3} parent=223 // loop_pre_header
          _
        $region226: #{mat_gru_cell_forward.3} parent=223 // loop_header
          %s279 = sphi 0, %s283
          %p280 = scmp.ge.s32.totalorder %s279, 1
          %s284 = sphi %s256, %s256
          %s285 = sphi %s257, %s257
        $region227: #{mat_gru_cell_forward.3} parent=223 // loop_header_branch
          %282 = sbr.rel (%p280) target = $region231
        $region228: #{mat_gru_cell_forward.3} parent=223 // loop_body
          %v286 = vld [vmem:[%s284] sm:%s277]
          %287 = vst [vmem:[%s285] sm:%s277] %v286
        $region229: #{mat_gru_cell_forward.3} parent=223 // loop_footer
          %s283 = sadd.s32 1, %s279
        $region230: #{mat_gru_cell_forward.3} parent=223 // loop_footer_branch
          %278 = sbr.rel target = $region226
        $region231: #{mat_gru_cell_forward.3} parent=223 // loop_exit
          _
      $region224: #{mat_gru_cell_forward.3} parent=208 // pred_fallthru
        _
    $region209: #{mat_gru_cell_forward.3} parent=1 // pred_fallthru
      _
    // Predicated region
    $region210: #{mat_gru_cell_forward.3} parent=1 // pred_check
      _
    $region211: #{mat_gru_cell_forward.3} parent=1 // pred_check_branch
      %261 = sbr.rel (0) target = $region213
    $region212: #{mat_gru_cell_forward.3} parent=1 // pred_region
      %s263 = ssub.s32 2, 1
      loop: start=0, step=1, limit=1
      $region214: #{mat_gru_cell_forward.3} parent=212 // loop_pre_header
        _
      $region215: #{mat_gru_cell_forward.3} parent=212 // loop_header
        %s265 = sphi 0, %s269
        %p266 = scmp.ge.s32.totalorder %s265, 1
        %s270 = sphi %s256, %s256
        %s271 = sphi %s257, %s257
      $region216: #{mat_gru_cell_forward.3} parent=212 // loop_header_branch
        %268 = sbr.rel (%p266) target = $region220
      $region217: #{mat_gru_cell_forward.3} parent=212 // loop_body
        %v272 = vld [vmem:[%s270] sm:%s263]
        %273 = vst [vmem:[%s271] sm:%s263] %v272
      $region218: #{mat_gru_cell_forward.3} parent=212 // loop_footer
        %s269 = sadd.s32 1, %s265
      $region219: #{mat_gru_cell_forward.3} parent=212 // loop_footer_branch
        %264 = sbr.rel target = $region215
      $region220: #{mat_gru_cell_forward.3} parent=212 // loop_exit
        _
    $region213: #{mat_gru_cell_forward.3} parent=1 // pred_fallthru
      _
    // Predicated region
    $region232: #{mat_gru_cell_forward.3} parent=1 // pred_check
      _
    $region233: #{mat_gru_cell_forward.3} parent=1 // pred_check_branch
      %290 = sbr.rel (0) target = $region235
    $region234: #{mat_gru_cell_forward.3} parent=1 // pred_region
      %291 = vsyncadd [#allocation3], 16
    $region235: #{mat_gru_cell_forward.3} parent=1 // pred_fallthru
      _
    %s292 = sld [smem:[#allocation5 + $0x7]]
    %s293 = scalar_lea.vmem %s7, %s292
    %s294 = scalar_lea.vmem [#allocation2], 7
    // Predicated region
    $region236: #{mat_gru_cell_forward.3} parent=1 // pred_check
      _
    $region237: #{mat_gru_cell_forward.3} parent=1 // pred_check_branch
      %296 = sbr.rel target = $region239
    $region238: #{mat_gru_cell_forward.3} parent=1 // pred_region
      // Predicated region
      $region251: #{mat_gru_cell_forward.3} parent=238 // pred_check
        _
      $region252: #{mat_gru_cell_forward.3} parent=238 // pred_check_branch
        %312 = sbr.rel (0) target = $region254
      $region253: #{mat_gru_cell_forward.3} parent=238 // pred_region
        %s314 = ssub.s32 2, 1
        loop: start=0, step=1, limit=1
        $region255: #{mat_gru_cell_forward.3} parent=253 // loop_pre_header
          _
        $region256: #{mat_gru_cell_forward.3} parent=253 // loop_header
          %s316 = sphi 0, %s320
          %p317 = scmp.ge.s32.totalorder %s316, 1
          %s321 = sphi %s293, %s293
          %s322 = sphi %s294, %s294
        $region257: #{mat_gru_cell_forward.3} parent=253 // loop_header_branch
          %319 = sbr.rel (%p317) target = $region261
        $region258: #{mat_gru_cell_forward.3} parent=253 // loop_body
          %v323 = vld [vmem:[%s321] sm:%s314]
          %324 = vst [vmem:[%s322] sm:%s314] %v323
        $region259: #{mat_gru_cell_forward.3} parent=253 // loop_footer
          %s320 = sadd.s32 1, %s316
        $region260: #{mat_gru_cell_forward.3} parent=253 // loop_footer_branch
          %315 = sbr.rel target = $region256
        $region261: #{mat_gru_cell_forward.3} parent=253 // loop_exit
          _
      $region254: #{mat_gru_cell_forward.3} parent=238 // pred_fallthru
        _
    $region239: #{mat_gru_cell_forward.3} parent=1 // pred_fallthru
      _
    // Predicated region
    $region240: #{mat_gru_cell_forward.3} parent=1 // pred_check
      _
    $region241: #{mat_gru_cell_forward.3} parent=1 // pred_check_branch
      %298 = sbr.rel (0) target = $region243
    $region242: #{mat_gru_cell_forward.3} parent=1 // pred_region
      %s300 = ssub.s32 2, 1
      loop: start=0, step=1, limit=1
      $region244: #{mat_gru_cell_forward.3} parent=242 // loop_pre_header
        _
      $region245: #{mat_gru_cell_forward.3} parent=242 // loop_header
        %s302 = sphi 0, %s306
        %p303 = scmp.ge.s32.totalorder %s302, 1
        %s307 = sphi %s293, %s293
        %s308 = sphi %s294, %s294
      $region246: #{mat_gru_cell_forward.3} parent=242 // loop_header_branch
        %305 = sbr.rel (%p303) target = $region250
      $region247: #{mat_gru_cell_forward.3} parent=242 // loop_body
        %v309 = vld [vmem:[%s307] sm:%s300]
        %310 = vst [vmem:[%s308] sm:%s300] %v309
      $region248: #{mat_gru_cell_forward.3} parent=242 // loop_footer
        %s306 = sadd.s32 1, %s302
      $region249: #{mat_gru_cell_forward.3} parent=242 // loop_footer_branch
        %301 = sbr.rel target = $region245
      $region250: #{mat_gru_cell_forward.3} parent=242 // loop_exit
        _
    $region243: #{mat_gru_cell_forward.3} parent=1 // pred_fallthru
      _
    // Predicated region
    $region262: #{mat_gru_cell_forward.3} parent=1 // pred_check
      _
    $region263: #{mat_gru_cell_forward.3} parent=1 // pred_check_branch
      %327 = sbr.rel (0) target = $region265
    $region264: #{mat_gru_cell_forward.3} parent=1 // pred_region
      %328 = vsyncadd [#allocation3], 16
    $region265: #{mat_gru_cell_forward.3} parent=1 // pred_fallthru
      _
    %v329 = vld [vmem:[%s2] sm:$0xff]
    %v330 = vld [vmem:[%s4] sm:$0xff]
    %v331 = vld [vmem:[%s4 + $0x8] sm:$0xff]
    %v332 = vld [vmem:[%s4 + $0x10] sm:$0xff]
    %v333 = vld [vmem:[%s4 + $0x18] sm:$0xff]
    %vm334 = vcmask 261120
    %v336 = vsel %vm334, %v329, 0
    %338 = vmatpush.msra.mxu0 0.0
    %339 = vmatpush.msra.mxu0 0.0
    %340 = vmatpush.msra.mxu0 0.0
    %341 = vmatpush.msra.mxu0 0.0
    %342 = vmatpush.msra.mxu0 0.0
    %343 = vmatpush.msra.mxu0 0.0
    %344 = vmatpush.msra.mxu0 0.0
    %345 = vmatpush.msra.mxu0 0.0
    %346 = vmatpush.msra.mxu0 0.0
    %347 = vmatpush.msra.mxu0 0.0
    %348 = vmatpush.msra.mxu0 0.0
    %349 = vmatpush.msra.mxu0 0.0
    %350 = vmatpush.msra.mxu0 %v333
    %351 = vmatpush.msra.mxu0 %v332
    %352 = vmatpush.msra.mxu0 %v331
    %353 = vmatpush.msra.mxu0 %v330
    %354 = vmatmul.f32.gmra.mxu0 %v336
    %v355 = vpop.f32.mrf.mxu0
    %v356 = vadd.f32 0.0, %v355
    %357 = vdwg.mxu0
    %v358 = vld [vmem:[%s6] sm:$0xff]
    %v359 = vld [vmem:[%s1] sm:$0xff]
    %v360 = vtanh.pop %v359
    %s361 = smul.u32 1, 1
    %s362 = sshll.u32 %s361, 4
    %363 = dma.done [#allocation3], %s362
    %s364 = sshll.u32 %s361, 4
    %365 = dma.done [#allocation3], %s364
    %s366 = sshll.u32 %s361, 4
    %367 = dma.done [#allocation3], %s366
    %s368 = sshll.u32 %s361, 4
    %369 = dma.done [#allocation3], %s368
    %s370 = sshll.u32 %s361, 4
    %371 = dma.done [#allocation3], %s370
    %s372 = sshll.u32 %s361, 4
    %373 = dma.done [#allocation3], %s372
    %s374 = sshll.u32 %s361, 4
    %375 = dma.done [#allocation3], %s374
    %s376 = sshll.u32 %s361, 4
    %377 = dma.done [#allocation3], %s376
    %v378 = vld [vmem:[#allocation2] sm:$0xff]
    %380 = vset.pattern.permute.xlu0 0
    %381 = vperm.xlu0 %380, %v360
    %v382 = vpop.permute.xlu0 %381
    %v384 = vmul.f32 %v378, %v382
    %v385 = vld [vmem:[%s3] sm:$0xff]
    %v386 = vld [vmem:[%s3 + $0x8] sm:$0xff]
    %v387 = vld [vmem:[%s3 + $0x10] sm:$0xff]
    %v388 = vld [vmem:[%s3 + $0x18] sm:$0xff]
    %v390 = vsel %vm334, %v384, 0
    %392 = vmatpush.msra.mxu0 0.0
    %393 = vmatpush.msra.mxu0 0.0
    %394 = vmatpush.msra.mxu0 0.0
    %395 = vmatpush.msra.mxu0 0.0
    %396 = vmatpush.msra.mxu0 0.0
    %397 = vmatpush.msra.mxu0 0.0
    %398 = vmatpush.msra.mxu0 0.0
    %399 = vmatpush.msra.mxu0 0.0
    %400 = vmatpush.msra.mxu0 0.0
    %401 = vmatpush.msra.mxu0 0.0
    %402 = vmatpush.msra.mxu0 0.0
    %403 = vmatpush.msra.mxu0 0.0
    %404 = vmatpush.msra.mxu0 %v388
    %405 = vmatpush.msra.mxu0 %v387
    %406 = vmatpush.msra.mxu0 %v386
    %407 = vmatpush.msra.mxu0 %v385
    %408 = vmatmul.f32.gmra.mxu0 %v390
    %v409 = vpop.f32.mrf.mxu0
    %v410 = vadd.f32 0.0, %v409
    %411 = vdwg.mxu0
    %v412 = vadd.f32 %v410, %v356
    %v413 = vadd.f32 %v412, %v358
    %v414 = vxor.u32 %v413, 2147483648
    %v415 = vmul.f32 %v414, 1.442695
    %v416 = vpow.pop %v415
    %v417 = vadd.f32 %v416, 1.0
    %v418 = vrcp.pop %v417
    %v419 = vmul.f32 %v417, %v418
    %v420 = vsub.f32 1.0, %v419
    %v421 = vmul.f32 %v418, %v420
    %v422 = vadd.f32 %v418, %v421
    %vm423 = vweird.f32 %v417
    %vm424 = vweird.f32 %v418
    %vm425 = vmor %vm423, %vm424
    %v426 = vsel %vm425, %v418, %v422
    %v427 = vand.u32 2147483647, %v417
    %vm428 = vcmp.eq.f32.partialorder %v427, 8.507059e+37
    %v429 = vand.u32 %v417, 2147483648
    %v430 = vor.u32 1.1754944e-38, %v429
    %v431 = vsel %vm428, %v430, %v426
    %v432 = vmul.f32 1.0, %v431
    %433 = vrot.lane.b32.xlu0 %v329, 32
    %v434 = vpop.permute.xlu0 %433
    %v436 = vmul.f32 %v432, %v434
    %v437 = vld [vmem:[%s5] sm:$0xff]
    %v438 = vld [vmem:[%s5 + $0x8] sm:$0xff]
    %v439 = vld [vmem:[%s5 + $0x10] sm:$0xff]
    %v440 = vld [vmem:[%s5 + $0x18] sm:$0xff]
    %442 = vrot.lane.b32.xlu0 %v436, 96
    %v443 = vpop.permute.xlu0 %442
    %v444 = vsel %vm334, %v443, 0
    %446 = vmatpush.msra.mxu0 0.0
    %447 = vmatpush.msra.mxu0 0.0
    %448 = vmatpush.msra.mxu0 0.0
    %449 = vmatpush.msra.mxu0 0.0
    %450 = vmatpush.msra.mxu0 0.0
    %451 = vmatpush.msra.mxu0 0.0
    %452 = vmatpush.msra.mxu0 0.0
    %453 = vmatpush.msra.mxu0 0.0
    %454 = vmatpush.msra.mxu0 0.0
    %455 = vmatpush.msra.mxu0 0.0
    %456 = vmatpush.msra.mxu0 0.0
    %457 = vmatpush.msra.mxu0 0.0
    %458 = vmatpush.msra.mxu0 %v440
    %459 = vmatpush.msra.mxu0 %v439
    %460 = vmatpush.msra.mxu0 %v438
    %461 = vmatpush.msra.mxu0 %v437
    %462 = vmatmul.f32.gmra.mxu0 %v444
    %v463 = vpop.f32.mrf.mxu0
    %v464 = vadd.f32 0.0, %v463
    %465 = vdwg.mxu0
    %467 = vrot.lane.b32.xlu0 %v464, 64
    %v468 = vpop.permute.xlu0 %467
    %v470 = vadd.f32 %v410, %v468
    %v471 = vadd.f32 %v470, %v358
    %v472 = vmax.f32 %v471, 0.0
    %v473 = vsub.f32 1.0, %v432
    %v474 = vmul.f32 %v473, %v329
    %476 = vrot.lane.b32.xlu0 %v472, 64
    %v477 = vpop.permute.xlu0 %476
    %v479 = vmul.f32 %v432, %v477
    %v480 = vadd.f32 %v474, %v479
    %481 = vst.msk [vmem:[#allocation6] sm:$0xff] %vm334, %v480
    // Predicated region
    $region266: #{mat_gru_cell_forward.3} parent=1 // pred_check
      _
    $region267: #{mat_gru_cell_forward.3} parent=1 // pred_check_branch
      %483 = sbr.rel (0) target = $region269
    $region268: #{mat_gru_cell_forward.3} parent=1 // pred_region
      %485 = vsyncadd [#allocation7], 0
      %s487 = sshll.u32 [#allocation6], 4
      %s488 = int_to_ptr.vmem [resolvable:$true] %s487
      %s489 = sshll.u32 %s8, 4
      %s490 = int_to_ptr.hbm [resolvable:$true] %s489
      %492 = dma.vmem_to_hbm [thread:$0]  %s488, 128, %s490, [#allocation7]
    $region269: #{mat_gru_cell_forward.3} parent=1 // pred_fallthru
      _
    // Predicated region
    $region270: #{mat_gru_cell_forward.3} parent=1 // pred_check
      _
    $region271: #{mat_gru_cell_forward.3} parent=1 // pred_check_branch
      %494 = sbr.rel (0) target = $region273
    $region272: #{mat_gru_cell_forward.3} parent=1 // pred_region
      %496 = dma.done [#allocation7], 128
    $region273: #{mat_gru_cell_forward.3} parent=1 // pred_fallthru
      _
    %497 = vsyncpa [#allocation7], 1
  %498 = vsyncmov [#allocation3]
  %s499 = vpop.sfrf %498
  %p500 = scmp.eq.s32.totalorder %s499, 0
  %p501 = pneg %p500
  %503 = shalt.err (%p501)

</llo_original>
